<compile_context>
chip_gen: v7x
topology: tpu7x:2x2x1
jax: 0.10.0
libtpu: 0.0.40
codegen_flags: <defaults>
</compile_context>

<pallas_src>
import functools

import jax
import jax.numpy as jnp
import numpy as np
from jax.experimental import pallas as pl
from jax.experimental.pallas import tpu as pltpu

LEAKY_SLOPE = 0.2
BN_EPS = 0.8  # BatchNorm1d(out_feat, 0.8): 0.8 is eps (positional-arg quirk). Keep it.
HIDDEN = (128, 256, 512, 1024)

# Row layout of the packed (8, 1024) vector slab.
_VEC_B1, _VEC_G2, _VEC_BE2, _VEC_G3, _VEC_BE3, _VEC_G4, _VEC_BE4, _VEC_B5 = range(8)


def _round_up(x, m):
    return (x + m - 1) // m * m


def _leaky_relu(x):
    # One vmul + one vmax per element (cheaper than compare+select).
    return jnp.maximum(x, LEAKY_SLOPE * x)


def _batchnorm_train(x, gamma, beta):
    """Training-mode BatchNorm1d (per-batch mean, biased var, eps=0.8), fused.

    Note: var = E[x^2] - mean^2 is cancellation-prone; acceptable here only
    because eps = 0.8 dominates. Switch to a centered pass if eps shrinks.
    """
    inv_n = 1.0 / x.shape[0]
    mean = jnp.sum(x, axis=0, keepdims=True) * inv_n
    ex2 = jnp.sum(x * x, axis=0, keepdims=True) * inv_n
    var = ex2 - mean * mean                   # biased variance (PyTorch train mode)
    inv = jax.lax.rsqrt(var + BN_EPS)         # transcendental -> EUP slot
    scale = gamma * inv
    shift = beta - mean * scale
    return x * scale + shift


def _make_generator_kernel(out_pad):
    def kernel(x_ref, vec_ref, w1_ref, w2_ref, w3_ref, w4_hbm, w5_hbm, o_ref,
               w4_vmem, w5_vmem, dma_sem):
        f32 = jnp.float32
        bf16 = jnp.bfloat16

        # Kick off the large w4 / w5 fetches immediately; they overlap with
        # layers 1-3 and are only waited on right before their own matmuls.
        cp4 = pltpu.make_async_copy(w4_hbm, w4_vmem, dma_sem.at[0])
        cp5 = pltpu.make_async_copy(w5_hbm, w5_vmem, dma_sem.at[1])
        cp4.start()
        cp5.start()

        # Static views into the packed vector slab (lane-aligned, no copies).
        b1 = vec_ref[_VEC_B1:_VEC_B1 + 1, :HIDDEN[0]]
        g2 = vec_ref[_VEC_G2:_VEC_G2 + 1, :HIDDEN[1]]
        be2 = vec_ref[_VEC_BE2:_VEC_BE2 + 1, :HIDDEN[1]]
        g3 = vec_ref[_VEC_G3:_VEC_G3 + 1, :HIDDEN[2]]
        be3 = vec_ref[_VEC_BE3:_VEC_BE3 + 1, :HIDDEN[2]]
        g4 = vec_ref[_VEC_G4:_VEC_G4 + 1, :HIDDEN[3]]
        be4 = vec_ref[_VEC_BE4:_VEC_BE4 + 1, :HIDDEN[3]]
        b5 = vec_ref[_VEC_B5:_VEC_B5 + 1, :out_pad]

        # ---- layer 1: Linear(padded[z|con] -> 128) + LeakyReLU (no BN) -----
        h = jnp.dot(x_ref[...].astype(bf16), w1_ref[...],
                    preferred_element_type=f32) + b1
        h = _leaky_relu(h)

        # ---- layer 2: Linear(128 -> 256) + BN + LeakyReLU -------------------
        # Pre-BN bias omitted: it is cancelled exactly by the BN mean subtraction.
        h = jnp.dot(h.astype(bf16), w2_ref[...], preferred_element_type=f32)
        h = _leaky_relu(_batchnorm_train(h, g2, be2))

        # ---- layer 3: Linear(256 -> 512) + BN + LeakyReLU --------------------
        h = jnp.dot(h.astype(bf16), w3_ref[...], preferred_element_type=f32)
        h = _leaky_relu(_batchnorm_train(h, g3, be3))

        # ---- layer 4: Linear(512 -> 1024) + BN + LeakyReLU -------------------
        cp4.wait()
        h = jnp.dot(h.astype(bf16), w4_vmem[...], preferred_element_type=f32)
        h = _leaky_relu(_batchnorm_train(h, g4, be4))

        # ---- layer 5: Linear(1024 -> out_pad), no BN / activation ------------
        cp5.wait()
        o_ref[...] = (
            jnp.dot(h.astype(bf16), w5_vmem[...], preferred_element_type=f32) + b5
        )

    return kernel


def init_generator_params(key, noise_len, condition_len, output_feature):
    """PyTorch-style init. Weights pre-transposed (in, out), lane-padded, bf16.

    b2/b3/b4 are generated (they exist in the PyTorch module) but are only used
    by the pure-JAX reference: under training-mode BN they are numerically inert,
    so the kernel drops them.
    """
    in_feat = noise_len + condition_len
    in_pad = _round_up(max(in_feat, 1), 128)
    out_pad = _round_up(output_feature, 128)
    vec_w = max(HIDDEN[3], out_pad)

    keys = jax.random.split(key, 10)

    def lin(kw, kb, fan_in, fan_out):
        bound = 1.0 / np.sqrt(fan_in)
        w = jax.random.uniform(kw, (fan_in, fan_out), jnp.float32, -bound, bound)
        b = jax.random.uniform(kb, (fan_out,), jnp.float32, -bound, bound)
        return w, b

    w1, b1 = lin(keys[0], keys[1], in_feat, HIDDEN[0])
    w1 = jnp.pad(w1, ((0, in_pad - in_feat), (0, 0)))      # single padded W1
    w2, b2 = lin(keys[2], keys[3], HIDDEN[0], HIDDEN[1])
    w3, b3 = lin(keys[4], keys[5], HIDDEN[1], HIDDEN[2])
    w4, b4 = lin(keys[6], keys[7], HIDDEN[2], HIDDEN[3])
    w5, b5 = lin(keys[8], keys[9], HIDDEN[3], output_feature)
    w5 = jnp.pad(w5, ((0, 0), (0, out_pad - output_feature)))
    b5p = jnp.pad(b5, (0, out_pad - output_feature))

    def row(v):
        v = jnp.asarray(v, jnp.float32)
        return jnp.pad(v, (0, vec_w - v.shape[0]))

    # One (8, vec_w) f32 slab holding every per-feature vector the kernel needs.
    vecs = jnp.stack([
        row(b1),
        row(jnp.ones((HIDDEN[1],))), row(jnp.zeros((HIDDEN[1],))),
        row(jnp.ones((HIDDEN[2],))), row(jnp.zeros((HIDDEN[2],))),
        row(jnp.ones((HIDDEN[3],))), row(jnp.zeros((HIDDEN[3],))),
        row(b5p),
    ])

    bf16 = jnp.bfloat16
    return {
        "w1": w1.astype(bf16), "w2": w2.astype(bf16), "w3": w3.astype(bf16),
        "w4": w4.astype(bf16), "w5": w5.astype(bf16),
        "vecs": vecs,
        # Reference-only (kernel omits pre-BN biases; BN cancels them exactly).
        "b1_f32": b1, "b2_f32": b2, "b3_f32": b3, "b4_f32": b4, "b5_f32": b5,
    }


def _concat_and_pad(z, con, in_pad):
    """Static specialization: skip con entirely when it has no features."""
    if con is not None and con.shape[-1] > 0:
        x = jnp.concatenate([z.astype(jnp.float32), con.astype(jnp.float32)], axis=-1)
    else:
        x = z.astype(jnp.float32)
    return jnp.pad(x, ((0, 0), (0, in_pad - x.shape[1])))


@functools.partial(jax.jit, static_argnames=("output_feature",))
def generator_forward(z, con, params, output_feature):
    in_pad = params["w1"].shape[0]
    out_pad = params["w5"].shape[1]
    x = _concat_and_pad(z, con, in_pad)
    batch = x.shape[0]

    vmem = pltpu.MemorySpace.VMEM
    out = pl.pallas_call(
        _make_generator_kernel(out_pad),
        out_shape=jax.ShapeDtypeStruct((batch, out_pad), jnp.float32),
        in_specs=[
            pl.BlockSpec(memory_space=vmem),     # x  (batch, 128)
            pl.BlockSpec(memory_space=vmem),     # packed vectors (8, 1024)
            pl.BlockSpec(memory_space=vmem),     # w1 (128, 128)
            pl.BlockSpec(memory_space=vmem),     # w2 (128, 256)
            pl.BlockSpec(memory_space=vmem),     # w3 (256, 512)
            pl.BlockSpec(memory_space=pl.ANY),   # w4 (512, 1024)  -> manual DMA
            pl.BlockSpec(memory_space=pl.ANY),   # w5 (1024, out)  -> manual DMA
        ],
        out_specs=pl.BlockSpec(memory_space=vmem),
        scratch_shapes=[
            pltpu.VMEM((HIDDEN[2], HIDDEN[3]), jnp.bfloat16),  # w4 landing buffer
            pltpu.VMEM((HIDDEN[3], out_pad), jnp.bfloat16),    # w5 landing buffer
            pltpu.SemaphoreType.DMA((2,)),
        ],
    )(x, params["vecs"], params["w1"], params["w2"], params["w3"],
      params["w4"], params["w5"])
    return out[:, :output_feature]


def _reference_forward(z, con, params, output_feature):
    """Pure-JAX reference mirroring the PyTorch module (INCLUDING pre-BN biases,
    which the kernel drops because training-mode BN cancels them)."""
    bf16, f32 = jnp.bfloat16, jnp.float32
    in_pad = params["w1"].shape[0]
    out_pad = params["w5"].shape[1]
    x = _concat_and_pad(z, con, in_pad)

    h = jnp.dot(x.astype(bf16), params["w1"], preferred_element_type=f32) + params["b1_f32"]
    h = _leaky_relu(h)
    for wk, bk, width in (("w2", "b2_f32", HIDDEN[1]),
                          ("w3", "b3_f32", HIDDEN[2]),
                          ("w4", "b4_f32", HIDDEN[3])):
        h = jnp.dot(h.astype(bf16), params[wk], preferred_element_type=f32) + params[bk]
        gamma = jnp.ones((1, width), f32)
        beta = jnp.zeros((1, width), f32)
        h = _leaky_relu(_batchnorm_train(h, gamma, beta))
    out = jnp.dot(h.astype(bf16), params["w5"], preferred_element_type=f32)
    out = out + jnp.pad(params["b5_f32"], (0, out_pad - output_feature))
    return out[:, :output_feature]


if __name__ == "__main__":
    # Small shapes consistent with the module (hidden widths 128/256/512/1024
    # are fixed by the architecture itself).
    noise_len = 12
    condition_len = 4
    output_feature = 20
    batch = 8

    key = jax.random.PRNGKey(0)
    k_par, k_z, k_c = jax.random.split(key, 3)

    # --- conditional path ---------------------------------------------------
    params = init_generator_params(k_par, noise_len, condition_len, output_feature)
    z = jax.random.normal(k_z, (batch, noise_len), dtype=jnp.float32)
    con = jax.random.normal(k_c, (batch, condition_len), dtype=jnp.float32)

    out = jax.block_until_ready(generator_forward(z, con, params, output_feature))
    assert out.shape == (batch, output_feature), out.shape
    assert bool(jnp.all(jnp.isfinite(out)))
    ref = jax.block_until_ready(_reference_forward(z, con, params, output_feature))
    np.testing.assert_allclose(np.asarray(out), np.asarray(ref), rtol=5e-2, atol=5e-2)

    # --- unconditioned path (condition_len == 0, statically specialized) -----
    params0 = init_generator_params(k_par, noise_len, 0, output_feature)
    out0 = jax.block_until_ready(generator_forward(z, None, params0, output_feature))
    ref0 = jax.block_until_ready(_reference_forward(z, None, params0, output_feature))
    np.testing.assert_allclose(np.asarray(out0), np.asarray(ref0), rtol=5e-2, atol=5e-2)

    print("KERNEL_OK")
</pallas_src>

<mosaic_0001>
module attributes {stable_mosaic.version = 11 : i64} {
  func.func @kernel(%arg0: memref<8x128xf32, #tpu.memory_space<vmem>>, %arg1: memref<8x1024xf32, #tpu.memory_space<vmem>>, %arg2: memref<128x128xbf16, #tpu.memory_space<vmem>>, %arg3: memref<128x256xbf16, #tpu.memory_space<vmem>>, %arg4: memref<256x512xbf16, #tpu.memory_space<vmem>>, %arg5: memref<512x1024xbf16, #tpu.memory_space<any>>, %arg6: memref<1024x128xbf16, #tpu.memory_space<any>>, %arg7: memref<8x128xf32, #tpu.memory_space<vmem>>, %arg8: memref<512x1024xbf16, #tpu.memory_space<vmem>>, %arg9: memref<1024x128xbf16, #tpu.memory_space<vmem>>, %arg10: memref<2x!tpu.dma_semaphore, #tpu.memory_space<semaphore_mem>>) attributes {dimension_semantics = [], scalar_prefetch = 0 : i64, scratch_operands = 3 : i64, tpu.core_type = #tpu.core_type<tc>} {
    %c0_i32 = arith.constant 0 : i32
    %0 = tpu.memref_slice %arg10[%c0_i32] : memref<2x!tpu.dma_semaphore, #tpu.memory_space<semaphore_mem>> -> memref<1x!tpu.dma_semaphore, #tpu.memory_space<semaphore_mem>>
    %1 = tpu.memref_squeeze %0 : memref<1x!tpu.dma_semaphore, #tpu.memory_space<semaphore_mem>> -> memref<!tpu.dma_semaphore, #tpu.memory_space<semaphore_mem>>
    tpu.enqueue_dma source(%arg5 : memref<512x1024xbf16, #tpu.memory_space<any>>) target(%arg8 : memref<512x1024xbf16, #tpu.memory_space<vmem>>) target_semaphore(%1 : memref<!tpu.dma_semaphore, #tpu.memory_space<semaphore_mem>>)
    %c1_i32 = arith.constant 1 : i32
    %2 = tpu.memref_slice %arg10[%c1_i32] : memref<2x!tpu.dma_semaphore, #tpu.memory_space<semaphore_mem>> -> memref<1x!tpu.dma_semaphore, #tpu.memory_space<semaphore_mem>>
    %3 = tpu.memref_squeeze %2 : memref<1x!tpu.dma_semaphore, #tpu.memory_space<semaphore_mem>> -> memref<!tpu.dma_semaphore, #tpu.memory_space<semaphore_mem>>
    tpu.enqueue_dma source(%arg6 : memref<1024x128xbf16, #tpu.memory_space<any>>) target(%arg9 : memref<1024x128xbf16, #tpu.memory_space<vmem>>) target_semaphore(%3 : memref<!tpu.dma_semaphore, #tpu.memory_space<semaphore_mem>>)
    %c0 = arith.constant 0 : index
    %c0_0 = arith.constant 0 : index
    %4 = vector.load %arg1[%c0, %c0_0] : memref<8x1024xf32, #tpu.memory_space<vmem>>, vector<1x128xf32>
    %c1 = arith.constant 1 : index
    %c0_1 = arith.constant 0 : index
    %5 = vector.load %arg1[%c1, %c0_1] : memref<8x1024xf32, #tpu.memory_space<vmem>>, vector<1x256xf32>
    %c2 = arith.constant 2 : index
    %c0_2 = arith.constant 0 : index
    %6 = vector.load %arg1[%c2, %c0_2] : memref<8x1024xf32, #tpu.memory_space<vmem>>, vector<1x256xf32>
    %c3 = arith.constant 3 : index
    %c0_3 = arith.constant 0 : index
    %7 = vector.load %arg1[%c3, %c0_3] : memref<8x1024xf32, #tpu.memory_space<vmem>>, vector<1x512xf32>
    %c4 = arith.constant 4 : index
    %c0_4 = arith.constant 0 : index
    %8 = vector.load %arg1[%c4, %c0_4] : memref<8x1024xf32, #tpu.memory_space<vmem>>, vector<1x512xf32>
    %c5 = arith.constant 5 : index
    %c0_5 = arith.constant 0 : index
    %9 = vector.load %arg1[%c5, %c0_5] : memref<8x1024xf32, #tpu.memory_space<vmem>>, vector<1x1024xf32>
    %c6 = arith.constant 6 : index
    %c0_6 = arith.constant 0 : index
    %10 = vector.load %arg1[%c6, %c0_6] : memref<8x1024xf32, #tpu.memory_space<vmem>>, vector<1x1024xf32>
    %c7 = arith.constant 7 : index
    %c0_7 = arith.constant 0 : index
    %11 = vector.load %arg1[%c7, %c0_7] : memref<8x1024xf32, #tpu.memory_space<vmem>>, vector<1x128xf32>
    %c0_8 = arith.constant 0 : index
    %c0_9 = arith.constant 0 : index
    %12 = vector.load %arg0[%c0_8, %c0_9] : memref<8x128xf32, #tpu.memory_space<vmem>>, vector<8x128xf32>
    %13 = arith.truncf %12 : vector<8x128xf32> to vector<8x128xbf16>
    %c0_10 = arith.constant 0 : index
    %c0_11 = arith.constant 0 : index
    %14 = vector.load %arg2[%c0_10, %c0_11] : memref<128x128xbf16, #tpu.memory_space<vmem>>, vector<128x128xbf16>
    %cst = arith.constant dense<0.000000e+00> : vector<8x128xf32>
    %15 = tpu.matmul %13, %14, %cst {dimension_numbers = #tpu.dot_dimension_numbers<[1], [0], [0], [1], [0, 0, 1, 1], [], []>} : vector<8x128xbf16>, vector<128x128xbf16>, vector<8x128xf32> -> vector<8x128xf32>
    %16 = vector.broadcast %4 : vector<1x128xf32> to vector<8x128xf32>
    %17 = arith.addf %15, %16 : vector<8x128xf32>
    %cst_12 = arith.constant 2.000000e-01 : f32
    %18 = vector.broadcast %cst_12 : f32 to vector<8x128xf32>
    %19 = arith.mulf %18, %17 : vector<8x128xf32>
    %20 = arith.maximumf %17, %19 : vector<8x128xf32>
    %21 = arith.truncf %20 : vector<8x128xf32> to vector<8x128xbf16>
    %c0_13 = arith.constant 0 : index
    %c0_14 = arith.constant 0 : index
    %22 = vector.load %arg3[%c0_13, %c0_14] : memref<128x256xbf16, #tpu.memory_space<vmem>>, vector<128x256xbf16>
    %cst_15 = arith.constant dense<0.000000e+00> : vector<8x256xf32>
    %23 = tpu.matmul %21, %22, %cst_15 {dimension_numbers = #tpu.dot_dimension_numbers<[1], [0], [0], [1], [0, 0, 1, 1], [], []>} : vector<8x128xbf16>, vector<128x256xbf16>, vector<8x256xf32> -> vector<8x256xf32>
    %cst_16 = arith.constant dense<0.000000e+00> : vector<256xf32>
    %24 = vector.multi_reduction <add>, %23, %cst_16 [0] : vector<8x256xf32> to vector<256xf32>
    %25 = vector.shape_cast %24 : vector<256xf32> to vector<1x256xf32>
    %cst_17 = arith.constant 1.250000e-01 : f32
    %26 = vector.broadcast %cst_17 : f32 to vector<1x256xf32>
    %27 = arith.mulf %25, %26 : vector<1x256xf32>
    %28 = arith.mulf %23, %23 : vector<8x256xf32>
    %cst_18 = arith.constant dense<0.000000e+00> : vector<256xf32>
    %29 = vector.multi_reduction <add>, %28, %cst_18 [0] : vector<8x256xf32> to vector<256xf32>
    %30 = vector.shape_cast %29 : vector<256xf32> to vector<1x256xf32>
    %cst_19 = arith.constant 1.250000e-01 : f32
    %31 = vector.broadcast %cst_19 : f32 to vector<1x256xf32>
    %32 = arith.mulf %30, %31 : vector<1x256xf32>
    %33 = arith.mulf %27, %27 : vector<1x256xf32>
    %34 = arith.subf %32, %33 : vector<1x256xf32>
    %cst_20 = arith.constant 8.000000e-01 : f32
    %35 = vector.broadcast %cst_20 : f32 to vector<1x256xf32>
    %36 = arith.addf %34, %35 : vector<1x256xf32>
    %37 = math.rsqrt %36 : vector<1x256xf32>
    %38 = arith.mulf %5, %37 : vector<1x256xf32>
    %39 = arith.mulf %27, %38 : vector<1x256xf32>
    %40 = arith.subf %6, %39 : vector<1x256xf32>
    %41 = vector.broadcast %38 : vector<1x256xf32> to vector<8x256xf32>
    %42 = arith.mulf %23, %41 : vector<8x256xf32>
    %43 = vector.broadcast %40 : vector<1x256xf32> to vector<8x256xf32>
    %44 = arith.addf %42, %43 : vector<8x256xf32>
    %cst_21 = arith.constant 2.000000e-01 : f32
    %45 = vector.broadcast %cst_21 : f32 to vector<8x256xf32>
    %46 = arith.mulf %45, %44 : vector<8x256xf32>
    %47 = arith.maximumf %44, %46 : vector<8x256xf32>
    %48 = arith.truncf %47 : vector<8x256xf32> to vector<8x256xbf16>
    %c0_22 = arith.constant 0 : index
    %c0_23 = arith.constant 0 : index
    %49 = vector.load %arg4[%c0_22, %c0_23] : memref<256x512xbf16, #tpu.memory_space<vmem>>, vector<256x512xbf16>
    %cst_24 = arith.constant dense<0.000000e+00> : vector<8x512xf32>
    %50 = tpu.matmul %48, %49, %cst_24 {dimension_numbers = #tpu.dot_dimension_numbers<[1], [0], [0], [1], [0, 0, 1, 1], [], []>} : vector<8x256xbf16>, vector<256x512xbf16>, vector<8x512xf32> -> vector<8x512xf32>
    %cst_25 = arith.constant dense<0.000000e+00> : vector<512xf32>
    %51 = vector.multi_reduction <add>, %50, %cst_25 [0] : vector<8x512xf32> to vector<512xf32>
    %52 = vector.shape_cast %51 : vector<512xf32> to vector<1x512xf32>
    %cst_26 = arith.constant 1.250000e-01 : f32
    %53 = vector.broadcast %cst_26 : f32 to vector<1x512xf32>
    %54 = arith.mulf %52, %53 : vector<1x512xf32>
    %55 = arith.mulf %50, %50 : vector<8x512xf32>
    %cst_27 = arith.constant dense<0.000000e+00> : vector<512xf32>
    %56 = vector.multi_reduction <add>, %55, %cst_27 [0] : vector<8x512xf32> to vector<512xf32>
    %57 = vector.shape_cast %56 : vector<512xf32> to vector<1x512xf32>
    %cst_28 = arith.constant 1.250000e-01 : f32
    %58 = vector.broadcast %cst_28 : f32 to vector<1x512xf32>
    %59 = arith.mulf %57, %58 : vector<1x512xf32>
    %60 = arith.mulf %54, %54 : vector<1x512xf32>
    %61 = arith.subf %59, %60 : vector<1x512xf32>
    %cst_29 = arith.constant 8.000000e-01 : f32
    %62 = vector.broadcast %cst_29 : f32 to vector<1x512xf32>
    %63 = arith.addf %61, %62 : vector<1x512xf32>
    %64 = math.rsqrt %63 : vector<1x512xf32>
    %65 = arith.mulf %7, %64 : vector<1x512xf32>
    %66 = arith.mulf %54, %65 : vector<1x512xf32>
    %67 = arith.subf %8, %66 : vector<1x512xf32>
    %68 = vector.broadcast %65 : vector<1x512xf32> to vector<8x512xf32>
    %69 = arith.mulf %50, %68 : vector<8x512xf32>
    %70 = vector.broadcast %67 : vector<1x512xf32> to vector<8x512xf32>
    %71 = arith.addf %69, %70 : vector<8x512xf32>
    %cst_30 = arith.constant 2.000000e-01 : f32
    %72 = vector.broadcast %cst_30 : f32 to vector<8x512xf32>
    %73 = arith.mulf %72, %71 : vector<8x512xf32>
    %74 = arith.maximumf %71, %73 : vector<8x512xf32>
    %c0_i32_31 = arith.constant 0 : i32
    %75 = tpu.memref_slice %arg10[%c0_i32_31] : memref<2x!tpu.dma_semaphore, #tpu.memory_space<semaphore_mem>> -> memref<1x!tpu.dma_semaphore, #tpu.memory_space<semaphore_mem>>
    %76 = tpu.memref_squeeze %75 : memref<1x!tpu.dma_semaphore, #tpu.memory_space<semaphore_mem>> -> memref<!tpu.dma_semaphore, #tpu.memory_space<semaphore_mem>>
    tpu.wait_dma2 semaphore(%76 : memref<!tpu.dma_semaphore, #tpu.memory_space<semaphore_mem>>) src(%arg5 : memref<512x1024xbf16, #tpu.memory_space<any>>) dst(%arg8 : memref<512x1024xbf16, #tpu.memory_space<vmem>>)
    %77 = arith.truncf %74 : vector<8x512xf32> to vector<8x512xbf16>
    %c0_32 = arith.constant 0 : index
    %c0_33 = arith.constant 0 : index
    %78 = vector.load %arg8[%c0_32, %c0_33] : memref<512x1024xbf16, #tpu.memory_space<vmem>>, vector<512x1024xbf16>
    %cst_34 = arith.constant dense<0.000000e+00> : vector<8x1024xf32>
    %79 = tpu.matmul %77, %78, %cst_34 {dimension_numbers = #tpu.dot_dimension_numbers<[1], [0], [0], [1], [0, 0, 1, 1], [], []>} : vector<8x512xbf16>, vector<512x1024xbf16>, vector<8x1024xf32> -> vector<8x1024xf32>
    %cst_35 = arith.constant dense<0.000000e+00> : vector<1024xf32>
    %80 = vector.multi_reduction <add>, %79, %cst_35 [0] : vector<8x1024xf32> to vector<1024xf32>
    %81 = vector.shape_cast %80 : vector<1024xf32> to vector<1x1024xf32>
    %cst_36 = arith.constant 1.250000e-01 : f32
    %82 = vector.broadcast %cst_36 : f32 to vector<1x1024xf32>
    %83 = arith.mulf %81, %82 : vector<1x1024xf32>
    %84 = arith.mulf %79, %79 : vector<8x1024xf32>
    %cst_37 = arith.constant dense<0.000000e+00> : vector<1024xf32>
    %85 = vector.multi_reduction <add>, %84, %cst_37 [0] : vector<8x1024xf32> to vector<1024xf32>
    %86 = vector.shape_cast %85 : vector<1024xf32> to vector<1x1024xf32>
    %cst_38 = arith.constant 1.250000e-01 : f32
    %87 = vector.broadcast %cst_38 : f32 to vector<1x1024xf32>
    %88 = arith.mulf %86, %87 : vector<1x1024xf32>
    %89 = arith.mulf %83, %83 : vector<1x1024xf32>
    %90 = arith.subf %88, %89 : vector<1x1024xf32>
    %cst_39 = arith.constant 8.000000e-01 : f32
    %91 = vector.broadcast %cst_39 : f32 to vector<1x1024xf32>
    %92 = arith.addf %90, %91 : vector<1x1024xf32>
    %93 = math.rsqrt %92 : vector<1x1024xf32>
    %94 = arith.mulf %9, %93 : vector<1x1024xf32>
    %95 = arith.mulf %83, %94 : vector<1x1024xf32>
    %96 = arith.subf %10, %95 : vector<1x1024xf32>
    %97 = vector.broadcast %94 : vector<1x1024xf32> to vector<8x1024xf32>
    %98 = arith.mulf %79, %97 : vector<8x1024xf32>
    %99 = vector.broadcast %96 : vector<1x1024xf32> to vector<8x1024xf32>
    %100 = arith.addf %98, %99 : vector<8x1024xf32>
    %cst_40 = arith.constant 2.000000e-01 : f32
    %101 = vector.broadcast %cst_40 : f32 to vector<8x1024xf32>
    %102 = arith.mulf %101, %100 : vector<8x1024xf32>
    %103 = arith.maximumf %100, %102 : vector<8x1024xf32>
    %c1_i32_41 = arith.constant 1 : i32
    %104 = tpu.memref_slice %arg10[%c1_i32_41] : memref<2x!tpu.dma_semaphore, #tpu.memory_space<semaphore_mem>> -> memref<1x!tpu.dma_semaphore, #tpu.memory_space<semaphore_mem>>
    %105 = tpu.memref_squeeze %104 : memref<1x!tpu.dma_semaphore, #tpu.memory_space<semaphore_mem>> -> memref<!tpu.dma_semaphore, #tpu.memory_space<semaphore_mem>>
    tpu.wait_dma2 semaphore(%105 : memref<!tpu.dma_semaphore, #tpu.memory_space<semaphore_mem>>) src(%arg6 : memref<1024x128xbf16, #tpu.memory_space<any>>) dst(%arg9 : memref<1024x128xbf16, #tpu.memory_space<vmem>>)
    %106 = arith.truncf %103 : vector<8x1024xf32> to vector<8x1024xbf16>
    %c0_42 = arith.constant 0 : index
    %c0_43 = arith.constant 0 : index
    %107 = vector.load %arg9[%c0_42, %c0_43] : memref<1024x128xbf16, #tpu.memory_space<vmem>>, vector<1024x128xbf16>
    %cst_44 = arith.constant dense<0.000000e+00> : vector<8x128xf32>
    %108 = tpu.matmul %106, %107, %cst_44 {dimension_numbers = #tpu.dot_dimension_numbers<[1], [0], [0], [1], [0, 0, 1, 1], [], []>} : vector<8x1024xbf16>, vector<1024x128xbf16>, vector<8x128xf32> -> vector<8x128xf32>
    %109 = vector.broadcast %11 : vector<1x128xf32> to vector<8x128xf32>
    %110 = arith.addf %108, %109 : vector<8x128xf32>
    %c0_45 = arith.constant 0 : index
    %c0_46 = arith.constant 0 : index
    %111 = vector.load %arg7[%c0_45, %c0_46] : memref<8x128xf32, #tpu.memory_space<vmem>>, vector<8x128xf32>
    tpu.vector_store %arg7[%c0_45, %c0_46], %110 {strides = array<i32>} : memref<8x128xf32, #tpu.memory_space<vmem>>, vector<8x128xf32>,
    return
  }
}

</mosaic_0001>

<llo_original>
// kernel: generator_forward.1
$region0: #{generator_forward.1}
  #allocation0 [shape = 'u32[]', space=smem, size = 0x4, offset = 0x4, fixed_abs, tag = 'smem constant byte address 0x4 - core index']
  #allocation1 [shape = 'u32[144,128]{1,0:T(1,128)}', space=vmem, size = 0x12000, scoped, tag = 'internal scratch']
  #allocation2 [shape = 'bf16[512,1024]{1,0:T(16,128)(2,1)}', space=vmem, size = 0x100000, scoped, tag = 'scratch operand']
  #allocation3 [shape = 'bf16[1024,128]{1,0:T(16,128)(2,1)}', space=vmem, size = 0x40000, scoped, tag = 'scratch operand']
  #allocation4 [shape = 's32[2]{0}', space=sflag, size = 0x8, scoped, tag = 'scratch operand']
  #allocation14 [shape = 's32[]', space=sflag, size = 0x4, offset = 0, fixed_abs, tag = 'sflag constant byte address 0x0 - dummy sync flag']
  #allocation16 [shape = 's32[]', space=sflag, size = 0x4, offset = 0, fixed_abs, tag = 'sflag constant byte address 0x0 - dummy sync flag']
  #allocation17 [shape = 's32[]', space=sflag, size = 0x4, offset = 0, fixed_abs, tag = 'sflag constant byte address 0x0 - dummy sync flag']
  #allocation18 [shape = 'u32[]', space=smem, size = 0x4, offset = 0x44, fixed_abs, tag = 'smem constant byte address 0x44 - assertion arg 0']
  #allocation19 [shape = 'u32[]', space=smem, size = 0x4, offset = 0x48, fixed_abs, tag = 'smem constant byte address 0x48 - assertion arg 1']
  %s0 = inlined_call_operand.vmem [shape: f32[8,128], index: 0, kind: input, shape index: {}]
  %s1 = inlined_call_operand.hbm [shape: f32[8,1024], index: 1, kind: input, shape index: {}]
  %s2 = inlined_call_operand.hbm [shape: bf16[128,128], index: 2, kind: input, shape index: {}]
  %s3 = inlined_call_operand.hbm [shape: bf16[128,256], index: 3, kind: input, shape index: {}]
  %s4 = inlined_call_operand.hbm [shape: bf16[256,512], index: 4, kind: input, shape index: {}]
  %s5 = inlined_call_operand.hbm [shape: bf16[512,1024], index: 5, kind: input, shape index: {}]
  %s6 = inlined_call_operand.hbm [shape: bf16[1024,128], index: 6, kind: input, shape index: {}]
  %s7 = inlined_call_operand.hbm [shape: f32[8,128], index: 7, kind: output, shape index: {}]
  %s8 = sld [smem:[#allocation0]]
  $region50: #{generator_forward.1} parent=0
    _
  %s10 = ssub.s32 1, %s8
  %s11 = scalar_select 0, %s10, %s8
  $region1: #{generator_forward.1} parent=0
    #allocation5 [shape = 'u8[32768]{0}', space=vmem, size = 0x8000, scoped, tag = 'input window, operand 1, single buffered']
    #allocation6 [shape = 's32[1]{0}', space=sflag, size = 0x4, scoped, tag = 'scoped memory for generator_forward.1']
    #allocation7 [shape = 's32[1]{0}', space=sflag, size = 0x4, scoped, tag = 'scoped memory for generator_forward.1']
    #allocation8 [shape = 'u8[32768]{0}', space=vmem, size = 0x8000, scoped, tag = 'input window, operand 2, single buffered']
    #allocation9 [shape = 's32[1]{0}', space=sflag, size = 0x4, scoped, tag = 'scoped memory for generator_forward.1']
    #allocation10 [shape = 'u8[65536]{0}', space=vmem, size = 0x10000, scoped, tag = 'input window, operand 3, single buffered']
    #allocation11 [shape = 'u8[262144]{0}', space=vmem, size = 0x40000, scoped, tag = 'input window, operand 4, single buffered']
    #allocation12 [shape = 's32[1]{0}', space=sflag, size = 0x4, scoped, tag = 'scoped memory for generator_forward.1']
    #allocation13 [shape = 'u8[4096]{0}', space=vmem, size = 0x1000, scoped, tag = 'output window, operand 0, single buffered']
    #allocation15 [shape = 'u32[9]{0}', space=smem, size = 0x24, scoped, tag = 'DMA stride descriptor']
    %12 = vsyncpa [#allocation6], 0
    %13 = vsyncpa [#allocation9], 0
    %14 = vsyncpa [#allocation12], 0
    %15 = vsyncpa [#allocation7], 0
    // Predicated region
    $region2: #{generator_forward.1} parent=1 // pred_check
      _
    $region3: #{generator_forward.1} parent=1 // pred_check_branch
      %17 = sbr.rel (0) target = $region5
    $region4: #{generator_forward.1} parent=1 // pred_region
      _
    $region5: #{generator_forward.1} parent=1 // pred_fallthru
      _
    // Predicated region
    $region6: #{generator_forward.1} parent=1 // pred_check
      _
    $region7: #{generator_forward.1} parent=1 // pred_check_branch
      %19 = sbr.rel (0) target = $region9
    $region8: #{generator_forward.1} parent=1 // pred_region
      %s21 = ssub.s32 1024, 1024
      %22 = vsyncadd [#allocation6], %s21
      %s24 = sshll.u32 [#allocation5], 4
      %s25 = int_to_ptr.vmem [resolvable:$true] %s24
      %27 = dma.hbm_to_vmem [thread:$0]  %s1, 1024, %s25, [#allocation6]
    $region9: #{generator_forward.1} parent=1 // pred_fallthru
      _
    // Predicated region
    $region10: #{generator_forward.1} parent=1 // pred_check
      _
    $region11: #{generator_forward.1} parent=1 // pred_check_branch
      %29 = sbr.rel (0) target = $region13
    $region12: #{generator_forward.1} parent=1 // pred_region
      %s31 = ssub.s32 1024, 1024
      %32 = vsyncadd [#allocation9], %s31
      %s33 = sshll.u32 [#allocation8], 4
      %s34 = int_to_ptr.vmem [resolvable:$true] %s33
      %39 = dma.hbm_to_vmem [thread:$0]  %s2, 1024, %s34, [#allocation9], 64, 64, 4
    $region13: #{generator_forward.1} parent=1 // pred_fallthru
      _
    // Predicated region
    $region14: #{generator_forward.1} parent=1 // pred_check
      _
    $region15: #{generator_forward.1} parent=1 // pred_check_branch
      %41 = sbr.rel (0) target = $region17
    $region16: #{generator_forward.1} parent=1 // pred_region
      %s43 = ssub.s32 2048, 2048
      %44 = vsyncadd [#allocation9], %s43
      %s45 = sshll.u32 [#allocation10], 4
      %s46 = int_to_ptr.vmem [resolvable:$true] %s45
      %51 = dma.hbm_to_vmem [thread:$0]  %s3, 2048, %s46, [#allocation9], 128, 128, 8
    $region17: #{generator_forward.1} parent=1 // pred_fallthru
      _
    // Predicated region
    $region18: #{generator_forward.1} parent=1 // pred_check
      _
    $region19: #{generator_forward.1} parent=1 // pred_check_branch
      %53 = sbr.rel (0) target = $region21
    $region20: #{generator_forward.1} parent=1 // pred_region
      %s55 = ssub.s32 8192, 8192
      %56 = vsyncadd [#allocation12], %s55
      %s57 = sshll.u32 [#allocation11], 4
      %s58 = int_to_ptr.vmem [resolvable:$true] %s57
      %63 = dma.hbm_to_vmem [thread:$0]  %s4, 8192, %s58, [#allocation12], 256, 256, 16
    $region21: #{generator_forward.1} parent=1 // pred_fallthru
      _
    // Predicated region
    $region22: #{generator_forward.1} parent=1 // pred_check
      _
    $region23: #{generator_forward.1} parent=1 // pred_check_branch
      %65 = sbr.rel (0) target = $region25
    $region24: #{generator_forward.1} parent=1 // pred_region
      %66 = dma.done [#allocation6], 1024
    $region25: #{generator_forward.1} parent=1 // pred_fallthru
      _
    // Predicated region
    $region26: #{generator_forward.1} parent=1 // pred_check
      _
    $region27: #{generator_forward.1} parent=1 // pred_check_branch
      %68 = sbr.rel (0) target = $region29
    $region28: #{generator_forward.1} parent=1 // pred_region
      %69 = dma.done [#allocation9], 1024
    $region29: #{generator_forward.1} parent=1 // pred_fallthru
      _
    // Predicated region
    $region30: #{generator_forward.1} parent=1 // pred_check
      _
    $region31: #{generator_forward.1} parent=1 // pred_check_branch
      %71 = sbr.rel (0) target = $region33
    $region32: #{generator_forward.1} parent=1 // pred_region
      %72 = dma.done [#allocation9], 2048
    $region33: #{generator_forward.1} parent=1 // pred_fallthru
      _
    // Predicated region
    $region34: #{generator_forward.1} parent=1 // pred_check
      _
    $region35: #{generator_forward.1} parent=1 // pred_check_branch
      %74 = sbr.rel (0) target = $region37
    $region36: #{generator_forward.1} parent=1 // pred_region
      %75 = dma.done [#allocation12], 8192
    $region37: #{generator_forward.1} parent=1 // pred_fallthru
      _
    %s78 = sshll.u32 1, 14
    %s79 = sxor.u32 4294967295, %s78
    %s81 = sld [smem:[#allocation0]]
    %s82 = sadd.s32 2, %s81
    %s84 = sshll.u32 7, 26
    %s85 = sxor.u32 4294967295, %s84
    %s86 = sand.u32 0, %s85
    %s87 = sshll.u32 %s82, 26
    %s88 = sor.u32 %s86, %s87
    %s89 = sshll.u32 [#allocation2], 4
    %s90 = int_to_ptr.vmem [resolvable:$true] %s89
    %93 = sst [smem:[#allocation15]] 1024
    %s94 = scalar_lea.smem [#allocation15], 1
    %95 = sst [smem:[%s94]] 1024
    %s96 = scalar_lea.smem [#allocation15], 2
    %97 = sst [smem:[%s96]] 8
    %s98 = scalar_lea.smem [#allocation15], 3
    %99 = sst [smem:[%s98]] 64
    %s100 = scalar_lea.smem [#allocation15], 4
    %101 = sst [smem:[%s100]] 128
    %s102 = scalar_lea.smem [#allocation15], 5
    %103 = sst [smem:[%s102]] 2
    %s104 = scalar_lea.smem [#allocation15], 6
    %105 = sst [smem:[%s104]] 512
    %s106 = scalar_lea.smem [#allocation15], 7
    %107 = sst [smem:[%s106]] 64
    %s108 = scalar_lea.smem [#allocation15], 8
    %109 = sst [smem:[%s108]] 4
    %111 = dma.general %s5, 32768, %s90, [#allocation4], [#allocation14], [#allocation15], %s88, 0
    %s112 = scalar_lea.sflag [#allocation4], 1
    // Predicated region
    $region38: #{generator_forward.1} parent=1 // pred_check
      _
    $region39: #{generator_forward.1} parent=1 // pred_check_branch
      %114 = sbr.rel target = $region41
    $region40: #{generator_forward.1} parent=1 // pred_region
      %115 = sst [smem:[#allocation18]] [#allocation17]
      %116 = sst [smem:[#allocation19]] [#allocation16]
    $region41: #{generator_forward.1} parent=1 // pred_fallthru
      _
    %118 = shalt.err (0)
    %s120 = sshll.u32 [#allocation3], 4
    %s121 = int_to_ptr.vmem [resolvable:$true] %s120
    %123 = dma.hbm_to_vmem [thread:$0]  %s6, 8192, %s121, %s112
    %v124 = vld [vmem:[#allocation5] ss:$0 sm:$0xff]
    %s125 = scalar_lea.vmem [#allocation5], 1
    %v126 = vld [vmem:[%s125] ss:$8 sm:$0x3]
    %s127 = scalar_lea.vmem [#allocation5], 2
    %v128 = vld [vmem:[%s127] ss:$8 sm:$0x3]
    %s129 = scalar_lea.vmem [#allocation5], 3
    %v130 = vld [vmem:[%s129] ss:$8 sm:$0xf]
    %s131 = scalar_lea.vmem [#allocation5], 4
    %v132 = vld [vmem:[%s131] ss:$8 sm:$0xf]
    %s133 = scalar_lea.vmem [#allocation5], 5
    %v134 = vld [vmem:[%s133] ss:$8 sm:$0xf]
    %v135 = vld [vmem:[%s133] ss:$8 sm:$0xf0]
    %v136 = vor.u32 %v134, %v135
    %s137 = scalar_lea.vmem [#allocation5], 6
    %v138 = vld [vmem:[%s137] ss:$8 sm:$0xf]
    %v139 = vld [vmem:[%s137] ss:$8 sm:$0xf0]
    %v140 = vor.u32 %v138, %v139
    %v141 = vld [vmem:[#allocation5 + $0x7] ss:$0 sm:$0xff]
    %v142 = vld [vmem:[%s0] sm:$0xff]
    %v143 = vpack.c.bf16 %v142, %v142
    %v144 = vld [vmem:[#allocation8] sm:$0xf]
    %v145 = vld [vmem:[#allocation8 + $0x4] sm:$0xf]
    %v146 = vld [vmem:[#allocation8 + $0x8] sm:$0xf]
    %v147 = vld [vmem:[#allocation8 + $0xc] sm:$0xf]
    %v148 = vld [vmem:[#allocation8 + $0x10] sm:$0xf]
    %v149 = vld [vmem:[#allocation8 + $0x14] sm:$0xf]
    %v150 = vld [vmem:[#allocation8 + $0x18] sm:$0xf]
    %v151 = vld [vmem:[#allocation8 + $0x1c] sm:$0xf]
    %v152 = vld [vmem:[#allocation8 + $0x20] sm:$0xf]
    %v153 = vld [vmem:[#allocation8 + $0x24] sm:$0xf]
    %v154 = vld [vmem:[#allocation8 + $0x28] sm:$0xf]
    %v155 = vld [vmem:[#allocation8 + $0x2c] sm:$0xf]
    %v156 = vld [vmem:[#allocation8 + $0x30] sm:$0xf]
    %v157 = vld [vmem:[#allocation8 + $0x34] sm:$0xf]
    %v158 = vld [vmem:[#allocation8 + $0x38] sm:$0xf]
    %v159 = vld [vmem:[#allocation8 + $0x3c] sm:$0xf]
    %v176 = vunpack.c.l.b16 %v144
    %v177 = vunpack.c.l.b16 %v145
    %v178 = vunpack.c.l.b16 %v146
    %v179 = vunpack.c.l.b16 %v147
    %v180 = vunpack.c.l.b16 %v148
    %v181 = vunpack.c.l.b16 %v149
    %v182 = vunpack.c.l.b16 %v150
    %v183 = vunpack.c.l.b16 %v151
    %v184 = vunpack.c.l.b16 %v152
    %v185 = vunpack.c.l.b16 %v153
    %v186 = vunpack.c.l.b16 %v154
    %v187 = vunpack.c.l.b16 %v155
    %v188 = vunpack.c.l.b16 %v156
    %v189 = vunpack.c.l.b16 %v157
    %v190 = vunpack.c.l.b16 %v158
    %v191 = vunpack.c.l.b16 %v159
    %v192 = vpack.c.b16 %v177, %v176
    %v193 = vpack.c.b16 %v179, %v178
    %v194 = vpack.c.b16 %v181, %v180
    %v195 = vpack.c.b16 %v183, %v182
    %v196 = vpack.c.b16 %v185, %v184
    %v197 = vpack.c.b16 %v187, %v186
    %v198 = vpack.c.b16 %v189, %v188
    %v199 = vpack.c.b16 %v191, %v190
    %208 = vmatprep.subr.bf16.mxu0 0
    %209 = vmatpush1.bf16.msra.mxu0 %v192
    %210 = vmatprep.subr.bf16.mxu0 0
    %211 = vmatpush1.bf16.msra.mxu0 %v193
    %212 = vmatprep.subr.bf16.mxu0 0
    %213 = vmatpush1.bf16.msra.mxu0 %v194
    %214 = vmatprep.subr.bf16.mxu0 0
    %215 = vmatpush1.bf16.msra.mxu0 %v195
    %216 = vmatprep.subr.bf16.mxu0 0
    %217 = vmatpush1.bf16.msra.mxu0 %v196
    %218 = vmatprep.subr.bf16.mxu0 0
    %219 = vmatpush1.bf16.msra.mxu0 %v197
    %220 = vmatprep.subr.bf16.mxu0 0
    %221 = vmatpush1.bf16.msra.mxu0 %v198
    %222 = vmatprep.subr.bf16.mxu0 0
    %223 = vmatpush1.bf16.msra.mxu0 %v199
    %224 = vmatprep.subr.bf16.mxu0 0
    %225 = vmatpush1.bf16.msra.mxu0 0
    %226 = vmatprep.subr.bf16.mxu0 0
    %227 = vmatpush1.bf16.msra.mxu0 0
    %228 = vmatprep.subr.bf16.mxu0 0
    %229 = vmatpush1.bf16.msra.mxu0 0
    %230 = vmatprep.subr.bf16.mxu0 0
    %231 = vmatpush1.bf16.msra.mxu0 0
    %232 = vmatprep.subr.bf16.mxu0 0
    %233 = vmatpush1.bf16.msra.mxu0 0
    %234 = vmatprep.subr.bf16.mxu0 0
    %235 = vmatpush1.bf16.msra.mxu0 0
    %236 = vmatprep.subr.bf16.mxu0 0
    %237 = vmatpush1.bf16.msra.mxu0 0
    %238 = vmatprep.subr.bf16.mxu0 0
    %239 = vmatpush1.bf16.msra.mxu0 0
    %240 = vmatprep.mubr.bf16.mxu0 0
    %241 = vmatmul.mubr.bf16.gmra.mrb[0].mxu0 %v143
    %v242 = vpop.f32.mrb[0].mxu0
    %v243 = vadd.f32 %v124, %v242
    %v244 = vpop.f32.mrb[0].mxu0
    %v245 = vpop.f32.mrb[0].mxu0
    %v246 = vpop.f32.mrb[0].mxu0
    %247 = vdwg.mxu0
    %v248 = vmul.f32 %v243, 0.2
    %v249 = vmax.f32 %v243, %v248
    %v250 = vpack.c.bf16 %v249, %v249
    %v251 = vld [vmem:[#allocation10] sm:$0xff]
    %v252 = vld [vmem:[#allocation10 + $0x8] sm:$0xff]
    %v253 = vld [vmem:[#allocation10 + $0x10] sm:$0xff]
    %v254 = vld [vmem:[#allocation10 + $0x18] sm:$0xff]
    %v255 = vld [vmem:[#allocation10 + $0x20] sm:$0xff]
    %v256 = vld [vmem:[#allocation10 + $0x28] sm:$0xff]
    %v257 = vld [vmem:[#allocation10 + $0x30] sm:$0xff]
    %v258 = vld [vmem:[#allocation10 + $0x38] sm:$0xff]
    %v259 = vld [vmem:[#allocation10 + $0x40] sm:$0xff]
    %v260 = vld [vmem:[#allocation10 + $0x48] sm:$0xff]
    %v261 = vld [vmem:[#allocation10 + $0x50] sm:$0xff]
    %v262 = vld [vmem:[#allocation10 + $0x58] sm:$0xff]
    %v263 = vld [vmem:[#allocation10 + $0x60] sm:$0xff]
    %v264 = vld [vmem:[#allocation10 + $0x68] sm:$0xff]
    %v265 = vld [vmem:[#allocation10 + $0x70] sm:$0xff]
    %v266 = vld [vmem:[#allocation10 + $0x78] sm:$0xff]
    %v283 = vunpack.c.l.b16 %v251
    %v284 = vunpack.c.h.b16 %v251
    %v285 = vunpack.c.l.b16 %v252
    %v286 = vunpack.c.h.b16 %v252
    %v287 = vunpack.c.l.b16 %v253
    %v288 = vunpack.c.h.b16 %v253
    %v289 = vunpack.c.l.b16 %v254
    %v290 = vunpack.c.h.b16 %v254
    %v291 = vunpack.c.l.b16 %v255
    %v292 = vunpack.c.h.b16 %v255
    %v293 = vunpack.c.l.b16 %v256
    %v294 = vunpack.c.h.b16 %v256
    %v295 = vunpack.c.l.b16 %v257
    %v296 = vunpack.c.h.b16 %v257
    %v297 = vunpack.c.l.b16 %v258
    %v298 = vunpack.c.h.b16 %v258
    %v299 = vunpack.c.l.b16 %v259
    %v300 = vunpack.c.h.b16 %v259
    %v301 = vunpack.c.l.b16 %v260
    %v302 = vunpack.c.h.b16 %v260
    %v303 = vunpack.c.l.b16 %v261
    %v304 = vunpack.c.h.b16 %v261
    %v305 = vunpack.c.l.b16 %v262
    %v306 = vunpack.c.h.b16 %v262
    %v307 = vunpack.c.l.b16 %v263
    %v308 = vunpack.c.h.b16 %v263
    %v309 = vunpack.c.l.b16 %v264
    %v310 = vunpack.c.h.b16 %v264
    %v311 = vunpack.c.l.b16 %v265
    %v312 = vunpack.c.h.b16 %v265
    %v313 = vunpack.c.l.b16 %v266
    %v314 = vunpack.c.h.b16 %v266
    %v315 = vpack.c.b16 %v285, %v283
    %v316 = vpack.c.b16 %v286, %v284
    %v317 = vpack.c.b16 %v289, %v287
    %v318 = vpack.c.b16 %v290, %v288
    %v319 = vpack.c.b16 %v293, %v291
    %v320 = vpack.c.b16 %v294, %v292
    %v321 = vpack.c.b16 %v297, %v295
    %v322 = vpack.c.b16 %v298, %v296
    %v323 = vpack.c.b16 %v301, %v299
    %v324 = vpack.c.b16 %v302, %v300
    %v325 = vpack.c.b16 %v305, %v303
    %v326 = vpack.c.b16 %v306, %v304
    %v327 = vpack.c.b16 %v309, %v307
    %v328 = vpack.c.b16 %v310, %v308
    %v329 = vpack.c.b16 %v313, %v311
    %v330 = vpack.c.b16 %v314, %v312
    %347 = vmatprep.subr.bf16.mxu0 %v316
    %348 = vmatpush1.bf16.msra.mxu0 %v315
    %349 = vmatprep.subr.bf16.mxu0 %v318
    %350 = vmatpush1.bf16.msra.mxu0 %v317
    %351 = vmatprep.subr.bf16.mxu0 %v320
    %352 = vmatpush1.bf16.msra.mxu0 %v319
    %353 = vmatprep.subr.bf16.mxu0 %v322
    %354 = vmatpush1.bf16.msra.mxu0 %v321
    %355 = vmatprep.subr.bf16.mxu0 %v324
    %356 = vmatpush1.bf16.msra.mxu0 %v323
    %357 = vmatprep.subr.bf16.mxu0 %v326
    %358 = vmatpush1.bf16.msra.mxu0 %v325
    %359 = vmatprep.subr.bf16.mxu0 %v328
    %360 = vmatpush1.bf16.msra.mxu0 %v327
    %361 = vmatprep.subr.bf16.mxu0 %v330
    %362 = vmatpush1.bf16.msra.mxu0 %v329
    %363 = vmatprep.subr.bf16.mxu0 0
    %364 = vmatpush1.bf16.msra.mxu0 0
    %365 = vmatprep.subr.bf16.mxu0 0
    %366 = vmatpush1.bf16.msra.mxu0 0
    %367 = vmatprep.subr.bf16.mxu0 0
    %368 = vmatpush1.bf16.msra.mxu0 0
    %369 = vmatprep.subr.bf16.mxu0 0
    %370 = vmatpush1.bf16.msra.mxu0 0
    %371 = vmatprep.subr.bf16.mxu0 0
    %372 = vmatpush1.bf16.msra.mxu0 0
    %373 = vmatprep.subr.bf16.mxu0 0
    %374 = vmatpush1.bf16.msra.mxu0 0
    %375 = vmatprep.subr.bf16.mxu0 0
    %376 = vmatpush1.bf16.msra.mxu0 0
    %377 = vmatprep.subr.bf16.mxu0 0
    %378 = vmatpush1.bf16.msra.mxu0 0
    %379 = vmatprep.mubr.bf16.mxu0 0
    %380 = vmatmul.mubr.bf16.gmra.mrb[0].mxu0 %v250
    %v381 = vpop.f32.mrb[0].mxu0
    %v382 = vadd.f32 0.0, %v381
    %v383 = vpop.f32.mrb[0].mxu0
    %v384 = vadd.f32 0.0, %v383
    %v385 = vpop.f32.mrb[0].mxu0
    %v386 = vpop.f32.mrb[0].mxu0
    %387 = vdwg.mxu0
    %v388 = vrot.slane %v382, 4
    %v389 = vadd.f32 %v382, %v388
    %v390 = vrot.slane %v389, 2
    %v391 = vadd.f32 %v389, %v390
    %v392 = vrot.slane %v391, 1
    %v393 = vadd.f32 %v391, %v392
    %v394 = vrot.slane %v384, 4
    %v395 = vadd.f32 %v384, %v394
    %v396 = vrot.slane %v395, 2
    %v397 = vadd.f32 %v395, %v396
    %v398 = vrot.slane %v397, 1
    %v399 = vadd.f32 %v397, %v398
    %v400 = vmul.f32 %v393, 0.125
    %v401 = vmul.f32 %v399, 0.125
    %v402 = vmul.f32 %v382, %v382
    %v403 = vmul.f32 %v384, %v384
    %v404 = vrot.slane %v402, 4
    %v405 = vadd.f32 %v402, %v404
    %v406 = vrot.slane %v405, 2
    %v407 = vadd.f32 %v405, %v406
    %v408 = vrot.slane %v407, 1
    %v409 = vadd.f32 %v407, %v408
    %v410 = vrot.slane %v403, 4
    %v411 = vadd.f32 %v403, %v410
    %v412 = vrot.slane %v411, 2
    %v413 = vadd.f32 %v411, %v412
    %v414 = vrot.slane %v413, 1
    %v415 = vadd.f32 %v413, %v414
    %v416 = vmul.f32 %v409, 0.125
    %v417 = vmul.f32 %v415, 0.125
    %v418 = vmul.f32 %v400, %v400
    %v419 = vmul.f32 %v401, %v401
    %v420 = vsub.f32 %v416, %v418
    %v421 = vsub.f32 %v417, %v419
    %v422 = vadd.f32 %v420, 0.8
    %v423 = vadd.f32 %v421, 0.8
    %v424 = vrsqrt.pop %v422
    %v425 = vrsqrt.pop %v423
    %v428 = vcombine.low %v424, %v425
    %v430 = vunpack.c.l.s4 1966171168
    %v431 = vunpack.c.0.s8 %v430
    %v432 = vlaneseq
    %v433 = vshrl.u32 %v432, 7
    %v434 = vsub.s32 %v431, %v433
    %v435 = vrot.slane %v428, %v434
    %v437 = vunpack.c.l.s4 1966171168
    %v438 = vunpack.c.0.s8 %v437
    %v439 = vlaneseq
    %v440 = vshrl.u32 %v439, 7
    %v441 = vsub.s32 %v438, %v440
    %v442 = vrot.slane %v435, %v441
    %v444 = vmul.f32 %v126, %v442
    %v446 = vlaneseq
    %v447 = vshrl.u32 %v446, 7
    %v448 = vsub.s32 0, %v447
    %v449 = vrot.slane %v444, %v448
    %v450 = vlaneseq
    %v451 = vshrl.u32 %v450, 7
    %v452 = vsub.s32 1, %v451
    %v453 = vrot.slane %v444, %v452
    %v456 = vmul.f32 %v400, %v449
    %v457 = vmul.f32 %v401, %v453
    %v460 = vcombine.low %v456, %v457
    %v462 = vunpack.c.l.s4 1966171168
    %v463 = vunpack.c.0.s8 %v462
    %v464 = vlaneseq
    %v465 = vshrl.u32 %v464, 7
    %v466 = vsub.s32 %v463, %v465
    %v467 = vrot.slane %v460, %v466
    %v469 = vunpack.c.l.s4 1966171168
    %v470 = vunpack.c.0.s8 %v469
    %v471 = vlaneseq
    %v472 = vshrl.u32 %v471, 7
    %v473 = vsub.s32 %v470, %v472
    %v474 = vrot.slane %v467, %v473
    %v476 = vsub.f32 %v128, %v474
    %v477 = vmul.f32 %v382, %v449
    %v478 = vmul.f32 %v384, %v453
    %v480 = vlaneseq
    %v481 = vshrl.u32 %v480, 7
    %v482 = vsub.s32 0, %v481
    %v483 = vrot.slane %v476, %v482
    %v484 = vlaneseq
    %v485 = vshrl.u32 %v484, 7
    %v486 = vsub.s32 1, %v485
    %v487 = vrot.slane %v476, %v486
    %v490 = vadd.f32 %v477, %v483
    %v491 = vadd.f32 %v478, %v487
    %v492 = vmul.f32 %v490, 0.2
    %v493 = vmul.f32 %v491, 0.2
    %v494 = vmax.f32 %v490, %v492
    %v495 = vmax.f32 %v491, %v493
    %v496 = vpack.c.bf16 %v494, %v494
    %v497 = vpack.c.bf16 %v495, %v495
    %v498 = vld [vmem:[#allocation11] sm:$0xff]
    %v499 = vld [vmem:[#allocation11 + $0x8] sm:$0xff]
    %v500 = vld [vmem:[#allocation11 + $0x10] sm:$0xff]
    %v501 = vld [vmem:[#allocation11 + $0x18] sm:$0xff]
    %v502 = vld [vmem:[#allocation11 + $0x20] sm:$0xff]
    %v503 = vld [vmem:[#allocation11 + $0x28] sm:$0xff]
    %v504 = vld [vmem:[#allocation11 + $0x30] sm:$0xff]
    %v505 = vld [vmem:[#allocation11 + $0x38] sm:$0xff]
    %v506 = vld [vmem:[#allocation11 + $0x40] sm:$0xff]
    %v507 = vld [vmem:[#allocation11 + $0x48] sm:$0xff]
    %v508 = vld [vmem:[#allocation11 + $0x50] sm:$0xff]
    %v509 = vld [vmem:[#allocation11 + $0x58] sm:$0xff]
    %v510 = vld [vmem:[#allocation11 + $0x60] sm:$0xff]
    %v511 = vld [vmem:[#allocation11 + $0x68] sm:$0xff]
    %v512 = vld [vmem:[#allocation11 + $0x70] sm:$0xff]
    %v513 = vld [vmem:[#allocation11 + $0x78] sm:$0xff]
    %v514 = vld [vmem:[#allocation11 + $0x80] sm:$0xff]
    %v515 = vld [vmem:[#allocation11 + $0x88] sm:$0xff]
    %v516 = vld [vmem:[#allocation11 + $0x90] sm:$0xff]
    %v517 = vld [vmem:[#allocation11 + $0x98] sm:$0xff]
    %v518 = vld [vmem:[#allocation11 + $0xa0] sm:$0xff]
    %v519 = vld [vmem:[#allocation11 + $0xa8] sm:$0xff]
    %v520 = vld [vmem:[#allocation11 + $0xb0] sm:$0xff]
    %v521 = vld [vmem:[#allocation11 + $0xb8] sm:$0xff]
    %v522 = vld [vmem:[#allocation11 + $0xc0] sm:$0xff]
    %v523 = vld [vmem:[#allocation11 + $0xc8] sm:$0xff]
    %v524 = vld [vmem:[#allocation11 + $0xd0] sm:$0xff]
    %v525 = vld [vmem:[#allocation11 + $0xd8] sm:$0xff]
    %v526 = vld [vmem:[#allocation11 + $0xe0] sm:$0xff]
    %v527 = vld [vmem:[#allocation11 + $0xe8] sm:$0xff]
    %v528 = vld [vmem:[#allocation11 + $0xf0] sm:$0xff]
    %v529 = vld [vmem:[#allocation11 + $0xf8] sm:$0xff]
    %v530 = vld [vmem:[#allocation11 + $0x100] sm:$0xff]
    %v531 = vld [vmem:[#allocation11 + $0x108] sm:$0xff]
    %v532 = vld [vmem:[#allocation11 + $0x110] sm:$0xff]
    %v533 = vld [vmem:[#allocation11 + $0x118] sm:$0xff]
    %v534 = vld [vmem:[#allocation11 + $0x120] sm:$0xff]
    %v535 = vld [vmem:[#allocation11 + $0x128] sm:$0xff]
    %v536 = vld [vmem:[#allocation11 + $0x130] sm:$0xff]
    %v537 = vld [vmem:[#allocation11 + $0x138] sm:$0xff]
    %v538 = vld [vmem:[#allocation11 + $0x140] sm:$0xff]
    %v539 = vld [vmem:[#allocation11 + $0x148] sm:$0xff]
    %v540 = vld [vmem:[#allocation11 + $0x150] sm:$0xff]
    %v541 = vld [vmem:[#allocation11 + $0x158] sm:$0xff]
    %v542 = vld [vmem:[#allocation11 + $0x160] sm:$0xff]
    %v543 = vld [vmem:[#allocation11 + $0x168] sm:$0xff]
    %v544 = vld [vmem:[#allocation11 + $0x170] sm:$0xff]
    %v545 = vld [vmem:[#allocation11 + $0x178] sm:$0xff]
    %v546 = vld [vmem:[#allocation11 + $0x180] sm:$0xff]
    %v547 = vld [vmem:[#allocation11 + $0x188] sm:$0xff]
    %v548 = vld [vmem:[#allocation11 + $0x190] sm:$0xff]
    %v549 = vld [vmem:[#allocation11 + $0x198] sm:$0xff]
    %v550 = vld [vmem:[#allocation11 + $0x1a0] sm:$0xff]
    %v551 = vld [vmem:[#allocation11 + $0x1a8] sm:$0xff]
    %v552 = vld [vmem:[#allocation11 + $0x1b0] sm:$0xff]
    %v553 = vld [vmem:[#allocation11 + $0x1b8] sm:$0xff]
    %v554 = vld [vmem:[#allocation11 + $0x1c0] sm:$0xff]
    %v555 = vld [vmem:[#allocation11 + $0x1c8] sm:$0xff]
    %v556 = vld [vmem:[#allocation11 + $0x1d0] sm:$0xff]
    %v557 = vld [vmem:[#allocation11 + $0x1d8] sm:$0xff]
    %v558 = vld [vmem:[#allocation11 + $0x1e0] sm:$0xff]
    %v559 = vld [vmem:[#allocation11 + $0x1e8] sm:$0xff]
    %v560 = vld [vmem:[#allocation11 + $0x1f0] sm:$0xff]
    %v561 = vld [vmem:[#allocation11 + $0x1f8] sm:$0xff]
    %v626 = vunpack.c.l.b16 %v498
    %v627 = vunpack.c.h.b16 %v498
    %v628 = vunpack.c.l.b16 %v499
    %v629 = vunpack.c.h.b16 %v499
    %v630 = vunpack.c.l.b16 %v500
    %v631 = vunpack.c.h.b16 %v500
    %v632 = vunpack.c.l.b16 %v501
    %v633 = vunpack.c.h.b16 %v501
    %v634 = vunpack.c.l.b16 %v502
    %v635 = vunpack.c.h.b16 %v502
    %v636 = vunpack.c.l.b16 %v503
    %v637 = vunpack.c.h.b16 %v503
    %v638 = vunpack.c.l.b16 %v504
    %v639 = vunpack.c.h.b16 %v504
    %v640 = vunpack.c.l.b16 %v505
    %v641 = vunpack.c.h.b16 %v505
    %v642 = vunpack.c.l.b16 %v506
    %v643 = vunpack.c.h.b16 %v506
    %v644 = vunpack.c.l.b16 %v507
    %v645 = vunpack.c.h.b16 %v507
    %v646 = vunpack.c.l.b16 %v508
    %v647 = vunpack.c.h.b16 %v508
    %v648 = vunpack.c.l.b16 %v509
    %v649 = vunpack.c.h.b16 %v509
    %v650 = vunpack.c.l.b16 %v510
    %v651 = vunpack.c.h.b16 %v510
    %v652 = vunpack.c.l.b16 %v511
    %v653 = vunpack.c.h.b16 %v511
    %v654 = vunpack.c.l.b16 %v512
    %v655 = vunpack.c.h.b16 %v512
    %v656 = vunpack.c.l.b16 %v513
    %v657 = vunpack.c.h.b16 %v513
    %v658 = vunpack.c.l.b16 %v514
    %v659 = vunpack.c.h.b16 %v514
    %v660 = vunpack.c.l.b16 %v515
    %v661 = vunpack.c.h.b16 %v515
    %v662 = vunpack.c.l.b16 %v516
    %v663 = vunpack.c.h.b16 %v516
    %v664 = vunpack.c.l.b16 %v517
    %v665 = vunpack.c.h.b16 %v517
    %v666 = vunpack.c.l.b16 %v518
    %v667 = vunpack.c.h.b16 %v518
    %v668 = vunpack.c.l.b16 %v519
    %v669 = vunpack.c.h.b16 %v519
    %v670 = vunpack.c.l.b16 %v520
    %v671 = vunpack.c.h.b16 %v520
    %v672 = vunpack.c.l.b16 %v521
    %v673 = vunpack.c.h.b16 %v521
    %v674 = vunpack.c.l.b16 %v522
    %v675 = vunpack.c.h.b16 %v522
    %v676 = vunpack.c.l.b16 %v523
    %v677 = vunpack.c.h.b16 %v523
    %v678 = vunpack.c.l.b16 %v524
    %v679 = vunpack.c.h.b16 %v524
    %v680 = vunpack.c.l.b16 %v525
    %v681 = vunpack.c.h.b16 %v525
    %v682 = vunpack.c.l.b16 %v526
    %v683 = vunpack.c.h.b16 %v526
    %v684 = vunpack.c.l.b16 %v527
    %v685 = vunpack.c.h.b16 %v527
    %v686 = vunpack.c.l.b16 %v528
    %v687 = vunpack.c.h.b16 %v528
    %v688 = vunpack.c.l.b16 %v529
    %v689 = vunpack.c.h.b16 %v529
    %v690 = vunpack.c.l.b16 %v530
    %v691 = vunpack.c.h.b16 %v530
    %v692 = vunpack.c.l.b16 %v531
    %v693 = vunpack.c.h.b16 %v531
    %v694 = vunpack.c.l.b16 %v532
    %v695 = vunpack.c.h.b16 %v532
    %v696 = vunpack.c.l.b16 %v533
    %v697 = vunpack.c.h.b16 %v533
    %v698 = vunpack.c.l.b16 %v534
    %v699 = vunpack.c.h.b16 %v534
    %v700 = vunpack.c.l.b16 %v535
    %v701 = vunpack.c.h.b16 %v535
    %v702 = vunpack.c.l.b16 %v536
    %v703 = vunpack.c.h.b16 %v536
    %v704 = vunpack.c.l.b16 %v537
    %v705 = vunpack.c.h.b16 %v537
    %v706 = vunpack.c.l.b16 %v538
    %v707 = vunpack.c.h.b16 %v538
    %v708 = vunpack.c.l.b16 %v539
    %v709 = vunpack.c.h.b16 %v539
    %v710 = vunpack.c.l.b16 %v540
    %v711 = vunpack.c.h.b16 %v540
    %v712 = vunpack.c.l.b16 %v541
    %v713 = vunpack.c.h.b16 %v541
    %v714 = vunpack.c.l.b16 %v542
    %v715 = vunpack.c.h.b16 %v542
    %v716 = vunpack.c.l.b16 %v543
    %v717 = vunpack.c.h.b16 %v543
    %v718 = vunpack.c.l.b16 %v544
    %v719 = vunpack.c.h.b16 %v544
    %v720 = vunpack.c.l.b16 %v545
    %v721 = vunpack.c.h.b16 %v545
    %v722 = vunpack.c.l.b16 %v546
    %v723 = vunpack.c.h.b16 %v546
    %v724 = vunpack.c.l.b16 %v547
    %v725 = vunpack.c.h.b16 %v547
    %v726 = vunpack.c.l.b16 %v548
    %v727 = vunpack.c.h.b16 %v548
    %v728 = vunpack.c.l.b16 %v549
    %v729 = vunpack.c.h.b16 %v549
    %v730 = vunpack.c.l.b16 %v550
    %v731 = vunpack.c.h.b16 %v550
    %v732 = vunpack.c.l.b16 %v551
    %v733 = vunpack.c.h.b16 %v551
    %v734 = vunpack.c.l.b16 %v552
    %v735 = vunpack.c.h.b16 %v552
    %v736 = vunpack.c.l.b16 %v553
    %v737 = vunpack.c.h.b16 %v553
    %v738 = vunpack.c.l.b16 %v554
    %v739 = vunpack.c.h.b16 %v554
    %v740 = vunpack.c.l.b16 %v555
    %v741 = vunpack.c.h.b16 %v555
    %v742 = vunpack.c.l.b16 %v556
    %v743 = vunpack.c.h.b16 %v556
    %v744 = vunpack.c.l.b16 %v557
    %v745 = vunpack.c.h.b16 %v557
    %v746 = vunpack.c.l.b16 %v558
    %v747 = vunpack.c.h.b16 %v558
    %v748 = vunpack.c.l.b16 %v559
    %v749 = vunpack.c.h.b16 %v559
    %v750 = vunpack.c.l.b16 %v560
    %v751 = vunpack.c.h.b16 %v560
    %v752 = vunpack.c.l.b16 %v561
    %v753 = vunpack.c.h.b16 %v561
    %v754 = vpack.c.b16 %v630, %v626
    %v755 = vpack.c.b16 %v631, %v627
    %v756 = vpack.c.b16 %v632, %v628
    %v757 = vpack.c.b16 %v633, %v629
    %v758 = vpack.c.b16 %v638, %v634
    %v759 = vpack.c.b16 %v639, %v635
    %v760 = vpack.c.b16 %v640, %v636
    %v761 = vpack.c.b16 %v641, %v637
    %v762 = vpack.c.b16 %v646, %v642
    %v763 = vpack.c.b16 %v647, %v643
    %v764 = vpack.c.b16 %v648, %v644
    %v765 = vpack.c.b16 %v649, %v645
    %v766 = vpack.c.b16 %v654, %v650
    %v767 = vpack.c.b16 %v655, %v651
    %v768 = vpack.c.b16 %v656, %v652
    %v769 = vpack.c.b16 %v657, %v653
    %v770 = vpack.c.b16 %v662, %v658
    %v771 = vpack.c.b16 %v663, %v659
    %v772 = vpack.c.b16 %v664, %v660
    %v773 = vpack.c.b16 %v665, %v661
    %v774 = vpack.c.b16 %v670, %v666
    %v775 = vpack.c.b16 %v671, %v667
    %v776 = vpack.c.b16 %v672, %v668
    %v777 = vpack.c.b16 %v673, %v669
    %v778 = vpack.c.b16 %v678, %v674
    %v779 = vpack.c.b16 %v679, %v675
    %v780 = vpack.c.b16 %v680, %v676
    %v781 = vpack.c.b16 %v681, %v677
    %v782 = vpack.c.b16 %v686, %v682
    %v783 = vpack.c.b16 %v687, %v683
    %v784 = vpack.c.b16 %v688, %v684
    %v785 = vpack.c.b16 %v689, %v685
    %v786 = vpack.c.b16 %v694, %v690
    %v787 = vpack.c.b16 %v695, %v691
    %v788 = vpack.c.b16 %v696, %v692
    %v789 = vpack.c.b16 %v697, %v693
    %v790 = vpack.c.b16 %v702, %v698
    %v791 = vpack.c.b16 %v703, %v699
    %v792 = vpack.c.b16 %v704, %v700
    %v793 = vpack.c.b16 %v705, %v701
    %v794 = vpack.c.b16 %v710, %v706
    %v795 = vpack.c.b16 %v711, %v707
    %v796 = vpack.c.b16 %v712, %v708
    %v797 = vpack.c.b16 %v713, %v709
    %v798 = vpack.c.b16 %v718, %v714
    %v799 = vpack.c.b16 %v719, %v715
    %v800 = vpack.c.b16 %v720, %v716
    %v801 = vpack.c.b16 %v721, %v717
    %v802 = vpack.c.b16 %v726, %v722
    %v803 = vpack.c.b16 %v727, %v723
    %v804 = vpack.c.b16 %v728, %v724
    %v805 = vpack.c.b16 %v729, %v725
    %v806 = vpack.c.b16 %v734, %v730
    %v807 = vpack.c.b16 %v735, %v731
    %v808 = vpack.c.b16 %v736, %v732
    %v809 = vpack.c.b16 %v737, %v733
    %v810 = vpack.c.b16 %v742, %v738
    %v811 = vpack.c.b16 %v743, %v739
    %v812 = vpack.c.b16 %v744, %v740
    %v813 = vpack.c.b16 %v745, %v741
    %v814 = vpack.c.b16 %v750, %v746
    %v815 = vpack.c.b16 %v751, %v747
    %v816 = vpack.c.b16 %v752, %v748
    %v817 = vpack.c.b16 %v753, %v749
    %882 = vmatprep.subr.bf16.mxu0 %v755
    %883 = vmatpush1.bf16.msra.mxu0 %v754
    %884 = vmatprep.subr.bf16.mxu0 %v759
    %885 = vmatpush1.bf16.msra.mxu0 %v758
    %886 = vmatprep.subr.bf16.mxu0 %v763
    %887 = vmatpush1.bf16.msra.mxu0 %v762
    %888 = vmatprep.subr.bf16.mxu0 %v767
    %889 = vmatpush1.bf16.msra.mxu0 %v766
    %890 = vmatprep.subr.bf16.mxu0 %v771
    %891 = vmatpush1.bf16.msra.mxu0 %v770
    %892 = vmatprep.subr.bf16.mxu0 %v775
    %893 = vmatpush1.bf16.msra.mxu0 %v774
    %894 = vmatprep.subr.bf16.mxu0 %v779
    %895 = vmatpush1.bf16.msra.mxu0 %v778
    %896 = vmatprep.subr.bf16.mxu0 %v783
    %897 = vmatpush1.bf16.msra.mxu0 %v782
    %898 = vmatprep.subr.bf16.mxu0 %v787
    %899 = vmatpush1.bf16.msra.mxu0 %v786
    %900 = vmatprep.subr.bf16.mxu0 %v791
    %901 = vmatpush1.bf16.msra.mxu0 %v790
    %902 = vmatprep.subr.bf16.mxu0 %v795
    %903 = vmatpush1.bf16.msra.mxu0 %v794
    %904 = vmatprep.subr.bf16.mxu0 %v799
    %905 = vmatpush1.bf16.msra.mxu0 %v798
    %906 = vmatprep.subr.bf16.mxu0 %v803
    %907 = vmatpush1.bf16.msra.mxu0 %v802
    %908 = vmatprep.subr.bf16.mxu0 %v807
    %909 = vmatpush1.bf16.msra.mxu0 %v806
    %910 = vmatprep.subr.bf16.mxu0 %v811
    %911 = vmatpush1.bf16.msra.mxu0 %v810
    %912 = vmatprep.subr.bf16.mxu0 %v815
    %913 = vmatpush1.bf16.msra.mxu0 %v814
    %914 = vmatprep.mubr.bf16.mxu0 %v497
    %915 = vmatmul.mubr.bf16.gmra.mrb[0].mxu0 %v496
    %v916 = vpop.f32.mrb[0].mxu0
    %v917 = vadd.f32 0.0, %v916
    %v918 = vpop.f32.mrb[0].mxu0
    %v919 = vadd.f32 0.0, %v918
    %v920 = vpop.f32.mrb[0].mxu0
    %v921 = vpop.f32.mrb[0].mxu0
    %922 = vdwg.mxu0
    %923 = vmatprep.subr.bf16.mxu0 %v757
    %924 = vmatpush1.bf16.msra.mxu0 %v756
    %925 = vmatprep.subr.bf16.mxu0 %v761
    %926 = vmatpush1.bf16.msra.mxu0 %v760
    %927 = vmatprep.subr.bf16.mxu0 %v765
    %928 = vmatpush1.bf16.msra.mxu0 %v764
    %929 = vmatprep.subr.bf16.mxu0 %v769
    %930 = vmatpush1.bf16.msra.mxu0 %v768
    %931 = vmatprep.subr.bf16.mxu0 %v773
    %932 = vmatpush1.bf16.msra.mxu0 %v772
    %933 = vmatprep.subr.bf16.mxu0 %v777
    %934 = vmatpush1.bf16.msra.mxu0 %v776
    %935 = vmatprep.subr.bf16.mxu0 %v781
    %936 = vmatpush1.bf16.msra.mxu0 %v780
    %937 = vmatprep.subr.bf16.mxu0 %v785
    %938 = vmatpush1.bf16.msra.mxu0 %v784
    %939 = vmatprep.subr.bf16.mxu0 %v789
    %940 = vmatpush1.bf16.msra.mxu0 %v788
    %941 = vmatprep.subr.bf16.mxu0 %v793
    %942 = vmatpush1.bf16.msra.mxu0 %v792
    %943 = vmatprep.subr.bf16.mxu0 %v797
    %944 = vmatpush1.bf16.msra.mxu0 %v796
    %945 = vmatprep.subr.bf16.mxu0 %v801
    %946 = vmatpush1.bf16.msra.mxu0 %v800
    %947 = vmatprep.subr.bf16.mxu0 %v805
    %948 = vmatpush1.bf16.msra.mxu0 %v804
    %949 = vmatprep.subr.bf16.mxu0 %v809
    %950 = vmatpush1.bf16.msra.mxu0 %v808
    %951 = vmatprep.subr.bf16.mxu0 %v813
    %952 = vmatpush1.bf16.msra.mxu0 %v812
    %953 = vmatprep.subr.bf16.mxu0 %v817
    %954 = vmatpush1.bf16.msra.mxu0 %v816
    %955 = vmatprep.mubr.bf16.mxu0 %v497
    %956 = vmatmul.mubr.bf16.gmra.mrb[0].mxu0 %v496
    %v957 = vpop.f32.mrb[0].mxu0
    %v958 = vadd.f32 0.0, %v957
    %v959 = vpop.f32.mrb[0].mxu0
    %v960 = vadd.f32 0.0, %v959
    %v961 = vpop.f32.mrb[0].mxu0
    %v962 = vpop.f32.mrb[0].mxu0
    %963 = vdwg.mxu0
    %v964 = vrot.slane %v917, 4
    %v965 = vadd.f32 %v917, %v964
    %v966 = vrot.slane %v965, 2
    %v967 = vadd.f32 %v965, %v966
    %v968 = vrot.slane %v967, 1
    %v969 = vadd.f32 %v967, %v968
    %v970 = vrot.slane %v919, 4
    %v971 = vadd.f32 %v919, %v970
    %v972 = vrot.slane %v971, 2
    %v973 = vadd.f32 %v971, %v972
    %v974 = vrot.slane %v973, 1
    %v975 = vadd.f32 %v973, %v974
    %v976 = vrot.slane %v958, 4
    %v977 = vadd.f32 %v958, %v976
    %v978 = vrot.slane %v977, 2
    %v979 = vadd.f32 %v977, %v978
    %v980 = vrot.slane %v979, 1
    %v981 = vadd.f32 %v979, %v980
    %v982 = vrot.slane %v960, 4
    %v983 = vadd.f32 %v960, %v982
    %v984 = vrot.slane %v983, 2
    %v985 = vadd.f32 %v983, %v984
    %v986 = vrot.slane %v985, 1
    %v987 = vadd.f32 %v985, %v986
    %v988 = vmul.f32 %v969, 0.125
    %v989 = vmul.f32 %v975, 0.125
    %v990 = vmul.f32 %v981, 0.125
    %v991 = vmul.f32 %v987, 0.125
    %v992 = vmul.f32 %v917, %v917
    %v993 = vmul.f32 %v919, %v919
    %v994 = vmul.f32 %v958, %v958
    %v995 = vmul.f32 %v960, %v960
    %v996 = vrot.slane %v992, 4
    %v997 = vadd.f32 %v992, %v996
    %v998 = vrot.slane %v997, 2
    %v999 = vadd.f32 %v997, %v998
    %v1000 = vrot.slane %v999, 1
    %v1001 = vadd.f32 %v999, %v1000
    %v1002 = vrot.slane %v993, 4
    %v1003 = vadd.f32 %v993, %v1002
    %v1004 = vrot.slane %v1003, 2
    %v1005 = vadd.f32 %v1003, %v1004
    %v1006 = vrot.slane %v1005, 1
    %v1007 = vadd.f32 %v1005, %v1006
    %v1008 = vrot.slane %v994, 4
    %v1009 = vadd.f32 %v994, %v1008
    %v1010 = vrot.slane %v1009, 2
    %v1011 = vadd.f32 %v1009, %v1010
    %v1012 = vrot.slane %v1011, 1
    %v1013 = vadd.f32 %v1011, %v1012
    %v1014 = vrot.slane %v995, 4
    %v1015 = vadd.f32 %v995, %v1014
    %v1016 = vrot.slane %v1015, 2
    %v1017 = vadd.f32 %v1015, %v1016
    %v1018 = vrot.slane %v1017, 1
    %v1019 = vadd.f32 %v1017, %v1018
    %v1020 = vmul.f32 %v1001, 0.125
    %v1021 = vmul.f32 %v1007, 0.125
    %v1022 = vmul.f32 %v1013, 0.125
    %v1023 = vmul.f32 %v1019, 0.125
    %v1024 = vmul.f32 %v988, %v988
    %v1025 = vmul.f32 %v989, %v989
    %v1026 = vmul.f32 %v990, %v990
    %v1027 = vmul.f32 %v991, %v991
    %v1028 = vsub.f32 %v1020, %v1024
    %v1029 = vsub.f32 %v1021, %v1025
    %v1030 = vsub.f32 %v1022, %v1026
    %v1031 = vsub.f32 %v1023, %v1027
    %v1032 = vadd.f32 %v1028, 0.8
    %v1033 = vadd.f32 %v1029, 0.8
    %v1034 = vadd.f32 %v1030, 0.8
    %v1035 = vadd.f32 %v1031, 0.8
    %v1036 = vrsqrt.pop %v1032
    %v1037 = vrsqrt.pop %v1033
    %v1038 = vrsqrt.pop %v1034
    %v1039 = vrsqrt.pop %v1035
    %v1044 = vcombine.low %v1036, %v1037
    %v1045 = vcombine.low %v1038, %v1039
    %v1047 = vunpack.c.l.s4 1966171168
    %v1048 = vunpack.c.0.s8 %v1047
    %v1049 = vlaneseq
    %v1050 = vshrl.u32 %v1049, 7
    %v1051 = vsub.s32 %v1048, %v1050
    %v1052 = vrot.slane %v1044, %v1051
    %v1054 = vunpack.c.l.s4 1966171168
    %v1055 = vunpack.c.0.s8 %v1054
    %v1056 = vlaneseq
    %v1057 = vshrl.u32 %v1056, 7
    %v1058 = vsub.s32 %v1055, %v1057
    %v1059 = vrot.slane %v1045, %v1058
    %v1060 = vcombine.low %v1052, %v1059
    %v1062 = vunpack.c.l.s4 1966171168
    %v1063 = vunpack.c.0.s8 %v1062
    %v1064 = vlaneseq
    %v1065 = vshrl.u32 %v1064, 7
    %v1066 = vsub.s32 %v1063, %v1065
    %v1067 = vrot.slane %v1060, %v1066
    %v1069 = vmul.f32 %v130, %v1067
    %v1071 = vlaneseq
    %v1072 = vshrl.u32 %v1071, 7
    %v1073 = vsub.s32 0, %v1072
    %v1074 = vrot.slane %v1069, %v1073
    %v1075 = vlaneseq
    %v1076 = vshrl.u32 %v1075, 7
    %v1077 = vsub.s32 1, %v1076
    %v1078 = vrot.slane %v1069, %v1077
    %v1079 = vlaneseq
    %v1080 = vshrl.u32 %v1079, 7
    %v1081 = vsub.s32 2, %v1080
    %v1082 = vrot.slane %v1069, %v1081
    %v1083 = vlaneseq
    %v1084 = vshrl.u32 %v1083, 7
    %v1085 = vsub.s32 3, %v1084
    %v1086 = vrot.slane %v1069, %v1085
    %v1091 = vmul.f32 %v988, %v1074
    %v1092 = vmul.f32 %v989, %v1078
    %v1093 = vmul.f32 %v990, %v1082
    %v1094 = vmul.f32 %v991, %v1086
    %v1099 = vcombine.low %v1091, %v1092
    %v1100 = vcombine.low %v1093, %v1094
    %v1102 = vunpack.c.l.s4 1966171168
    %v1103 = vunpack.c.0.s8 %v1102
    %v1104 = vlaneseq
    %v1105 = vshrl.u32 %v1104, 7
    %v1106 = vsub.s32 %v1103, %v1105
    %v1107 = vrot.slane %v1099, %v1106
    %v1109 = vunpack.c.l.s4 1966171168
    %v1110 = vunpack.c.0.s8 %v1109
    %v1111 = vlaneseq
    %v1112 = vshrl.u32 %v1111, 7
    %v1113 = vsub.s32 %v1110, %v1112
    %v1114 = vrot.slane %v1100, %v1113
    %v1115 = vcombine.low %v1107, %v1114
    %v1117 = vunpack.c.l.s4 1966171168
    %v1118 = vunpack.c.0.s8 %v1117
    %v1119 = vlaneseq
    %v1120 = vshrl.u32 %v1119, 7
    %v1121 = vsub.s32 %v1118, %v1120
    %v1122 = vrot.slane %v1115, %v1121
    %v1124 = vsub.f32 %v132, %v1122
    %v1125 = vmul.f32 %v917, %v1074
    %v1126 = vmul.f32 %v919, %v1078
    %v1127 = vmul.f32 %v958, %v1082
    %v1128 = vmul.f32 %v960, %v1086
    %v1130 = vlaneseq
    %v1131 = vshrl.u32 %v1130, 7
    %v1132 = vsub.s32 0, %v1131
    %v1133 = vrot.slane %v1124, %v1132
    %v1134 = vlaneseq
    %v1135 = vshrl.u32 %v1134, 7
    %v1136 = vsub.s32 1, %v1135
    %v1137 = vrot.slane %v1124, %v1136
    %v1138 = vlaneseq
    %v1139 = vshrl.u32 %v1138, 7
    %v1140 = vsub.s32 2, %v1139
    %v1141 = vrot.slane %v1124, %v1140
    %v1142 = vlaneseq
    %v1143 = vshrl.u32 %v1142, 7
    %v1144 = vsub.s32 3, %v1143
    %v1145 = vrot.slane %v1124, %v1144
    %v1150 = vadd.f32 %v1125, %v1133
    %v1151 = vadd.f32 %v1126, %v1137
    %v1152 = vadd.f32 %v1127, %v1141
    %v1153 = vadd.f32 %v1128, %v1145
    %v1154 = vmul.f32 %v1150, 0.2
    %v1155 = vmul.f32 %v1151, 0.2
    %v1156 = vmul.f32 %v1152, 0.2
    %v1157 = vmul.f32 %v1153, 0.2
    %v1158 = vmax.f32 %v1150, %v1154
    %v1159 = vmax.f32 %v1151, %v1155
    %v1160 = vmax.f32 %v1152, %v1156
    %v1161 = vmax.f32 %v1153, %v1157
    %s1162 = smul.u32 4, 64
    %s1163 = smul.u32 %s1162, 8
    %s1164 = sshll.u32 %s1163, 4
    %1165 = dma.done [#allocation4], %s1164
    %v1166 = vpack.c.bf16 %v1158, %v1158
    %v1167 = vpack.c.bf16 %v1159, %v1159
    %v1168 = vpack.c.bf16 %v1160, %v1160
    %v1169 = vpack.c.bf16 %v1161, %v1161
    %v1170 = vld [vmem:[#allocation2] sm:$0xff]
    %v1171 = vld [vmem:[#allocation2 + $0x8] sm:$0xff]
    %v1172 = vld [vmem:[#allocation2 + $0x10] sm:$0xff]
    %v1173 = vld [vmem:[#allocation2 + $0x18] sm:$0xff]
    %v1174 = vld [vmem:[#allocation2 + $0x20] sm:$0xff]
    %v1175 = vld [vmem:[#allocation2 + $0x28] sm:$0xff]
    %v1176 = vld [vmem:[#allocation2 + $0x30] sm:$0xff]
    %v1177 = vld [vmem:[#allocation2 + $0x38] sm:$0xff]
    %v1178 = vld [vmem:[#allocation2 + $0x40] sm:$0xff]
    %v1179 = vld [vmem:[#allocation2 + $0x48] sm:$0xff]
    %v1180 = vld [vmem:[#allocation2 + $0x50] sm:$0xff]
    %v1181 = vld [vmem:[#allocation2 + $0x58] sm:$0xff]
    %v1182 = vld [vmem:[#allocation2 + $0x60] sm:$0xff]
    %v1183 = vld [vmem:[#allocation2 + $0x68] sm:$0xff]
    %v1184 = vld [vmem:[#allocation2 + $0x70] sm:$0xff]
    %v1185 = vld [vmem:[#allocation2 + $0x78] sm:$0xff]
    %v1186 = vld [vmem:[#allocation2 + $0x80] sm:$0xff]
    %v1187 = vld [vmem:[#allocation2 + $0x88] sm:$0xff]
    %v1188 = vld [vmem:[#allocation2 + $0x90] sm:$0xff]
    %v1189 = vld [vmem:[#allocation2 + $0x98] sm:$0xff]
    %v1190 = vld [vmem:[#allocation2 + $0xa0] sm:$0xff]
    %v1191 = vld [vmem:[#allocation2 + $0xa8] sm:$0xff]
    %v1192 = vld [vmem:[#allocation2 + $0xb0] sm:$0xff]
    %v1193 = vld [vmem:[#allocation2 + $0xb8] sm:$0xff]
    %v1194 = vld [vmem:[#allocation2 + $0xc0] sm:$0xff]
    %v1195 = vld [vmem:[#allocation2 + $0xc8] sm:$0xff]
    %v1196 = vld [vmem:[#allocation2 + $0xd0] sm:$0xff]
    %v1197 = vld [vmem:[#allocation2 + $0xd8] sm:$0xff]
    %v1198 = vld [vmem:[#allocation2 + $0xe0] sm:$0xff]
    %v1199 = vld [vmem:[#allocation2 + $0xe8] sm:$0xff]
    %v1200 = vld [vmem:[#allocation2 + $0xf0] sm:$0xff]
    %v1201 = vld [vmem:[#allocation2 + $0xf8] sm:$0xff]
    %v1202 = vld [vmem:[#allocation2 + $0x100] sm:$0xff]
    %v1203 = vld [vmem:[#allocation2 + $0x108] sm:$0xff]
    %v1204 = vld [vmem:[#allocation2 + $0x110] sm:$0xff]
    %v1205 = vld [vmem:[#allocation2 + $0x118] sm:$0xff]
    %v1206 = vld [vmem:[#allocation2 + $0x120] sm:$0xff]
    %v1207 = vld [vmem:[#allocation2 + $0x128] sm:$0xff]
    %v1208 = vld [vmem:[#allocation2 + $0x130] sm:$0xff]
    %v1209 = vld [vmem:[#allocation2 + $0x138] sm:$0xff]
    %v1210 = vld [vmem:[#allocation2 + $0x140] sm:$0xff]
    %v1211 = vld [vmem:[#allocation2 + $0x148] sm:$0xff]
    %v1212 = vld [vmem:[#allocation2 + $0x150] sm:$0xff]
    %v1213 = vld [vmem:[#allocation2 + $0x158] sm:$0xff]
    %v1214 = vld [vmem:[#allocation2 + $0x160] sm:$0xff]
    %v1215 = vld [vmem:[#allocation2 + $0x168] sm:$0xff]
    %v1216 = vld [vmem:[#allocation2 + $0x170] sm:$0xff]
    %v1217 = vld [vmem:[#allocation2 + $0x178] sm:$0xff]
    %v1218 = vld [vmem:[#allocation2 + $0x180] sm:$0xff]
    %v1219 = vld [vmem:[#allocation2 + $0x188] sm:$0xff]
    %v1220 = vld [vmem:[#allocation2 + $0x190] sm:$0xff]
    %v1221 = vld [vmem:[#allocation2 + $0x198] sm:$0xff]
    %v1222 = vld [vmem:[#allocation2 + $0x1a0] sm:$0xff]
    %v1223 = vld [vmem:[#allocation2 + $0x1a8] sm:$0xff]
    %v1224 = vld [vmem:[#allocation2 + $0x1b0] sm:$0xff]
    %v1225 = vld [vmem:[#allocation2 + $0x1b8] sm:$0xff]
    %v1226 = vld [vmem:[#allocation2 + $0x1c0] sm:$0xff]
    %v1227 = vld [vmem:[#allocation2 + $0x1c8] sm:$0xff]
    %v1228 = vld [vmem:[#allocation2 + $0x1d0] sm:$0xff]
    %v1229 = vld [vmem:[#allocation2 + $0x1d8] sm:$0xff]
    %v1230 = vld [vmem:[#allocation2 + $0x1e0] sm:$0xff]
    %v1231 = vld [vmem:[#allocation2 + $0x1e8] sm:$0xff]
    %v1232 = vld [vmem:[#allocation2 + $0x1f0] sm:$0xff]
    %v1233 = vld [vmem:[#allocation2 + $0x1f8] sm:$0xff]
    %v1234 = vld [vmem:[#allocation2 + $0x200] sm:$0xff]
    %v1235 = vld [vmem:[#allocation2 + $0x208] sm:$0xff]
    %v1236 = vld [vmem:[#allocation2 + $0x210] sm:$0xff]
    %v1237 = vld [vmem:[#allocation2 + $0x218] sm:$0xff]
    %v1238 = vld [vmem:[#allocation2 + $0x220] sm:$0xff]
    %v1239 = vld [vmem:[#allocation2 + $0x228] sm:$0xff]
    %v1240 = vld [vmem:[#allocation2 + $0x230] sm:$0xff]
    %v1241 = vld [vmem:[#allocation2 + $0x238] sm:$0xff]
    %v1242 = vld [vmem:[#allocation2 + $0x240] sm:$0xff]
    %v1243 = vld [vmem:[#allocation2 + $0x248] sm:$0xff]
    %v1244 = vld [vmem:[#allocation2 + $0x250] sm:$0xff]
    %v1245 = vld [vmem:[#allocation2 + $0x258] sm:$0xff]
    %v1246 = vld [vmem:[#allocation2 + $0x260] sm:$0xff]
    %v1247 = vld [vmem:[#allocation2 + $0x268] sm:$0xff]
    %v1248 = vld [vmem:[#allocation2 + $0x270] sm:$0xff]
    %v1249 = vld [vmem:[#allocation2 + $0x278] sm:$0xff]
    %v1250 = vld [vmem:[#allocation2 + $0x280] sm:$0xff]
    %v1251 = vld [vmem:[#allocation2 + $0x288] sm:$0xff]
    %v1252 = vld [vmem:[#allocation2 + $0x290] sm:$0xff]
    %v1253 = vld [vmem:[#allocation2 + $0x298] sm:$0xff]
    %v1254 = vld [vmem:[#allocation2 + $0x2a0] sm:$0xff]
    %v1255 = vld [vmem:[#allocation2 + $0x2a8] sm:$0xff]
    %v1256 = vld [vmem:[#allocation2 + $0x2b0] sm:$0xff]
    %v1257 = vld [vmem:[#allocation2 + $0x2b8] sm:$0xff]
    %v1258 = vld [vmem:[#allocation2 + $0x2c0] sm:$0xff]
    %v1259 = vld [vmem:[#allocation2 + $0x2c8] sm:$0xff]
    %v1260 = vld [vmem:[#allocation2 + $0x2d0] sm:$0xff]
    %v1261 = vld [vmem:[#allocation2 + $0x2d8] sm:$0xff]
    %v1262 = vld [vmem:[#allocation2 + $0x2e0] sm:$0xff]
    %v1263 = vld [vmem:[#allocation2 + $0x2e8] sm:$0xff]
    %v1264 = vld [vmem:[#allocation2 + $0x2f0] sm:$0xff]
    %v1265 = vld [vmem:[#allocation2 + $0x2f8] sm:$0xff]
    %v1266 = vld [vmem:[#allocation2 + $0x300] sm:$0xff]
    %v1267 = vld [vmem:[#allocation2 + $0x308] sm:$0xff]
    %v1268 = vld [vmem:[#allocation2 + $0x310] sm:$0xff]
    %v1269 = vld [vmem:[#allocation2 + $0x318] sm:$0xff]
    %v1270 = vld [vmem:[#allocation2 + $0x320] sm:$0xff]
    %v1271 = vld [vmem:[#allocation2 + $0x328] sm:$0xff]
    %v1272 = vld [vmem:[#allocation2 + $0x330] sm:$0xff]
    %v1273 = vld [vmem:[#allocation2 + $0x338] sm:$0xff]
    %v1274 = vld [vmem:[#allocation2 + $0x340] sm:$0xff]
    %v1275 = vld [vmem:[#allocation2 + $0x348] sm:$0xff]
    %v1276 = vld [vmem:[#allocation2 + $0x350] sm:$0xff]
    %v1277 = vld [vmem:[#allocation2 + $0x358] sm:$0xff]
    %v1278 = vld [vmem:[#allocation2 + $0x360] sm:$0xff]
    %v1279 = vld [vmem:[#allocation2 + $0x368] sm:$0xff]
    %v1280 = vld [vmem:[#allocation2 + $0x370] sm:$0xff]
    %v1281 = vld [vmem:[#allocation2 + $0x378] sm:$0xff]
    %v1282 = vld [vmem:[#allocation2 + $0x380] sm:$0xff]
    %v1283 = vld [vmem:[#allocation2 + $0x388] sm:$0xff]
    %v1284 = vld [vmem:[#allocation2 + $0x390] sm:$0xff]
    %v1285 = vld [vmem:[#allocation2 + $0x398] sm:$0xff]
    %v1286 = vld [vmem:[#allocation2 + $0x3a0] sm:$0xff]
    %v1287 = vld [vmem:[#allocation2 + $0x3a8] sm:$0xff]
    %v1288 = vld [vmem:[#allocation2 + $0x3b0] sm:$0xff]
    %v1289 = vld [vmem:[#allocation2 + $0x3b8] sm:$0xff]
    %v1290 = vld [vmem:[#allocation2 + $0x3c0] sm:$0xff]
    %v1291 = vld [vmem:[#allocation2 + $0x3c8] sm:$0xff]
    %v1292 = vld [vmem:[#allocation2 + $0x3d0] sm:$0xff]
    %v1293 = vld [vmem:[#allocation2 + $0x3d8] sm:$0xff]
    %v1294 = vld [vmem:[#allocation2 + $0x3e0] sm:$0xff]
    %v1295 = vld [vmem:[#allocation2 + $0x3e8] sm:$0xff]
    %v1296 = vld [vmem:[#allocation2 + $0x3f0] sm:$0xff]
    %v1297 = vld [vmem:[#allocation2 + $0x3f8] sm:$0xff]
    %v1298 = vld [vmem:[#allocation2 + $0x400] sm:$0xff]
    %v1299 = vld [vmem:[#allocation2 + $0x408] sm:$0xff]
    %v1300 = vld [vmem:[#allocation2 + $0x410] sm:$0xff]
    %v1301 = vld [vmem:[#allocation2 + $0x418] sm:$0xff]
    %v1302 = vld [vmem:[#allocation2 + $0x420] sm:$0xff]
    %v1303 = vld [vmem:[#allocation2 + $0x428] sm:$0xff]
    %v1304 = vld [vmem:[#allocation2 + $0x430] sm:$0xff]
    %v1305 = vld [vmem:[#allocation2 + $0x438] sm:$0xff]
    %v1306 = vld [vmem:[#allocation2 + $0x440] sm:$0xff]
    %v1307 = vld [vmem:[#allocation2 + $0x448] sm:$0xff]
    %v1308 = vld [vmem:[#allocation2 + $0x450] sm:$0xff]
    %v1309 = vld [vmem:[#allocation2 + $0x458] sm:$0xff]
    %v1310 = vld [vmem:[#allocation2 + $0x460] sm:$0xff]
    %v1311 = vld [vmem:[#allocation2 + $0x468] sm:$0xff]
    %v1312 = vld [vmem:[#allocation2 + $0x470] sm:$0xff]
    %v1313 = vld [vmem:[#allocation2 + $0x478] sm:$0xff]
    %v1314 = vld [vmem:[#allocation2 + $0x480] sm:$0xff]
    %v1315 = vld [vmem:[#allocation2 + $0x488] sm:$0xff]
    %v1316 = vld [vmem:[#allocation2 + $0x490] sm:$0xff]
    %v1317 = vld [vmem:[#allocation2 + $0x498] sm:$0xff]
    %v1318 = vld [vmem:[#allocation2 + $0x4a0] sm:$0xff]
    %v1319 = vld [vmem:[#allocation2 + $0x4a8] sm:$0xff]
    %v1320 = vld [vmem:[#allocation2 + $0x4b0] sm:$0xff]
    %v1321 = vld [vmem:[#allocation2 + $0x4b8] sm:$0xff]
    %v1322 = vld [vmem:[#allocation2 + $0x4c0] sm:$0xff]
    %v1323 = vld [vmem:[#allocation2 + $0x4c8] sm:$0xff]
    %v1324 = vld [vmem:[#allocation2 + $0x4d0] sm:$0xff]
    %v1325 = vld [vmem:[#allocation2 + $0x4d8] sm:$0xff]
    %v1326 = vld [vmem:[#allocation2 + $0x4e0] sm:$0xff]
    %v1327 = vld [vmem:[#allocation2 + $0x4e8] sm:$0xff]
    %v1328 = vld [vmem:[#allocation2 + $0x4f0] sm:$0xff]
    %v1329 = vld [vmem:[#allocation2 + $0x4f8] sm:$0xff]
    %v1330 = vld [vmem:[#allocation2 + $0x500] sm:$0xff]
    %v1331 = vld [vmem:[#allocation2 + $0x508] sm:$0xff]
    %v1332 = vld [vmem:[#allocation2 + $0x510] sm:$0xff]
    %v1333 = vld [vmem:[#allocation2 + $0x518] sm:$0xff]
    %v1334 = vld [vmem:[#allocation2 + $0x520] sm:$0xff]
    %v1335 = vld [vmem:[#allocation2 + $0x528] sm:$0xff]
    %v1336 = vld [vmem:[#allocation2 + $0x530] sm:$0xff]
    %v1337 = vld [vmem:[#allocation2 + $0x538] sm:$0xff]
    %v1338 = vld [vmem:[#allocation2 + $0x540] sm:$0xff]
    %v1339 = vld [vmem:[#allocation2 + $0x548] sm:$0xff]
    %v1340 = vld [vmem:[#allocation2 + $0x550] sm:$0xff]
    %v1341 = vld [vmem:[#allocation2 + $0x558] sm:$0xff]
    %v1342 = vld [vmem:[#allocation2 + $0x560] sm:$0xff]
    %v1343 = vld [vmem:[#allocation2 + $0x568] sm:$0xff]
    %v1344 = vld [vmem:[#allocation2 + $0x570] sm:$0xff]
    %v1345 = vld [vmem:[#allocation2 + $0x578] sm:$0xff]
    %v1346 = vld [vmem:[#allocation2 + $0x580] sm:$0xff]
    %v1347 = vld [vmem:[#allocation2 + $0x588] sm:$0xff]
    %v1348 = vld [vmem:[#allocation2 + $0x590] sm:$0xff]
    %v1349 = vld [vmem:[#allocation2 + $0x598] sm:$0xff]
    %v1350 = vld [vmem:[#allocation2 + $0x5a0] sm:$0xff]
    %v1351 = vld [vmem:[#allocation2 + $0x5a8] sm:$0xff]
    %v1352 = vld [vmem:[#allocation2 + $0x5b0] sm:$0xff]
    %v1353 = vld [vmem:[#allocation2 + $0x5b8] sm:$0xff]
    %v1354 = vld [vmem:[#allocation2 + $0x5c0] sm:$0xff]
    %v1355 = vld [vmem:[#allocation2 + $0x5c8] sm:$0xff]
    %v1356 = vld [vmem:[#allocation2 + $0x5d0] sm:$0xff]
    %v1357 = vld [vmem:[#allocation2 + $0x5d8] sm:$0xff]
    %v1358 = vld [vmem:[#allocation2 + $0x5e0] sm:$0xff]
    %v1359 = vld [vmem:[#allocation2 + $0x5e8] sm:$0xff]
    %v1360 = vld [vmem:[#allocation2 + $0x5f0] sm:$0xff]
    %v1361 = vld [vmem:[#allocation2 + $0x5f8] sm:$0xff]
    %v1362 = vld [vmem:[#allocation2 + $0x600] sm:$0xff]
    %v1363 = vld [vmem:[#allocation2 + $0x608] sm:$0xff]
    %v1364 = vld [vmem:[#allocation2 + $0x610] sm:$0xff]
    %v1365 = vld [vmem:[#allocation2 + $0x618] sm:$0xff]
    %v1366 = vld [vmem:[#allocation2 + $0x620] sm:$0xff]
    %v1367 = vld [vmem:[#allocation2 + $0x628] sm:$0xff]
    %v1368 = vld [vmem:[#allocation2 + $0x630] sm:$0xff]
    %v1369 = vld [vmem:[#allocation2 + $0x638] sm:$0xff]
    %v1370 = vld [vmem:[#allocation2 + $0x640] sm:$0xff]
    %v1371 = vld [vmem:[#allocation2 + $0x648] sm:$0xff]
    %v1372 = vld [vmem:[#allocation2 + $0x650] sm:$0xff]
    %v1373 = vld [vmem:[#allocation2 + $0x658] sm:$0xff]
    %v1374 = vld [vmem:[#allocation2 + $0x660] sm:$0xff]
    %v1375 = vld [vmem:[#allocation2 + $0x668] sm:$0xff]
    %v1376 = vld [vmem:[#allocation2 + $0x670] sm:$0xff]
    %v1377 = vld [vmem:[#allocation2 + $0x678] sm:$0xff]
    %v1378 = vld [vmem:[#allocation2 + $0x680] sm:$0xff]
    %v1379 = vld [vmem:[#allocation2 + $0x688] sm:$0xff]
    %v1380 = vld [vmem:[#allocation2 + $0x690] sm:$0xff]
    %v1381 = vld [vmem:[#allocation2 + $0x698] sm:$0xff]
    %v1382 = vld [vmem:[#allocation2 + $0x6a0] sm:$0xff]
    %v1383 = vld [vmem:[#allocation2 + $0x6a8] sm:$0xff]
    %v1384 = vld [vmem:[#allocation2 + $0x6b0] sm:$0xff]
    %v1385 = vld [vmem:[#allocation2 + $0x6b8] sm:$0xff]
    %v1386 = vld [vmem:[#allocation2 + $0x6c0] sm:$0xff]
    %v1387 = vld [vmem:[#allocation2 + $0x6c8] sm:$0xff]
    %v1388 = vld [vmem:[#allocation2 + $0x6d0] sm:$0xff]
    %v1389 = vld [vmem:[#allocation2 + $0x6d8] sm:$0xff]
    %v1390 = vld [vmem:[#allocation2 + $0x6e0] sm:$0xff]
    %v1391 = vld [vmem:[#allocation2 + $0x6e8] sm:$0xff]
    %v1392 = vld [vmem:[#allocation2 + $0x6f0] sm:$0xff]
    %v1393 = vld [vmem:[#allocation2 + $0x6f8] sm:$0xff]
    %v1394 = vld [vmem:[#allocation2 + $0x700] sm:$0xff]
    %v1395 = vld [vmem:[#allocation2 + $0x708] sm:$0xff]
    %v1396 = vld [vmem:[#allocation2 + $0x710] sm:$0xff]
    %v1397 = vld [vmem:[#allocation2 + $0x718] sm:$0xff]
    %v1398 = vld [vmem:[#allocation2 + $0x720] sm:$0xff]
    %v1399 = vld [vmem:[#allocation2 + $0x728] sm:$0xff]
    %v1400 = vld [vmem:[#allocation2 + $0x730] sm:$0xff]
    %v1401 = vld [vmem:[#allocation2 + $0x738] sm:$0xff]
    %v1402 = vld [vmem:[#allocation2 + $0x740] sm:$0xff]
    %v1403 = vld [vmem:[#allocation2 + $0x748] sm:$0xff]
    %v1404 = vld [vmem:[#allocation2 + $0x750] sm:$0xff]
    %v1405 = vld [vmem:[#allocation2 + $0x758] sm:$0xff]
    %v1406 = vld [vmem:[#allocation2 + $0x760] sm:$0xff]
    %v1407 = vld [vmem:[#allocation2 + $0x768] sm:$0xff]
    %v1408 = vld [vmem:[#allocation2 + $0x770] sm:$0xff]
    %v1409 = vld [vmem:[#allocation2 + $0x778] sm:$0xff]
    %v1410 = vld [vmem:[#allocation2 + $0x780] sm:$0xff]
    %v1411 = vld [vmem:[#allocation2 + $0x788] sm:$0xff]
    %v1412 = vld [vmem:[#allocation2 + $0x790] sm:$0xff]
    %v1413 = vld [vmem:[#allocation2 + $0x798] sm:$0xff]
    %v1414 = vld [vmem:[#allocation2 + $0x7a0] sm:$0xff]
    %v1415 = vld [vmem:[#allocation2 + $0x7a8] sm:$0xff]
    %v1416 = vld [vmem:[#allocation2 + $0x7b0] sm:$0xff]
    %v1417 = vld [vmem:[#allocation2 + $0x7b8] sm:$0xff]
    %v1418 = vld [vmem:[#allocation2 + $0x7c0] sm:$0xff]
    %v1419 = vld [vmem:[#allocation2 + $0x7c8] sm:$0xff]
    %v1420 = vld [vmem:[#allocation2 + $0x7d0] sm:$0xff]
    %v1421 = vld [vmem:[#allocation2 + $0x7d8] sm:$0xff]
    %v1422 = vld [vmem:[#allocation2 + $0x7e0] sm:$0xff]
    %v1423 = vld [vmem:[#allocation2 + $0x7e8] sm:$0xff]
    %v1424 = vld [vmem:[#allocation2 + $0x7f0] sm:$0xff]
    %v1425 = vld [vmem:[#allocation2 + $0x7f8] sm:$0xff]
    %1426 = vmatprep.subr.bf16.mxu0 %v1171
    %1427 = vmatpush1.bf16.msra.mxu0 %v1170
    %1428 = vmatprep.subr.bf16.mxu0 %v1179
    %1429 = vmatpush1.bf16.msra.mxu0 %v1178
    %1430 = vmatprep.subr.bf16.mxu0 %v1187
    %1431 = vmatpush1.bf16.msra.mxu0 %v1186
    %1432 = vmatprep.subr.bf16.mxu0 %v1195
    %1433 = vmatpush1.bf16.msra.mxu0 %v1194
    %1434 = vmatprep.subr.bf16.mxu0 %v1203
    %1435 = vmatpush1.bf16.msra.mxu0 %v1202
    %1436 = vmatprep.subr.bf16.mxu0 %v1211
    %1437 = vmatpush1.bf16.msra.mxu0 %v1210
    %1438 = vmatprep.subr.bf16.mxu0 %v1219
    %1439 = vmatpush1.bf16.msra.mxu0 %v1218
    %1440 = vmatprep.subr.bf16.mxu0 %v1227
    %1441 = vmatpush1.bf16.msra.mxu0 %v1226
    %1442 = vmatprep.subr.bf16.mxu0 %v1235
    %1443 = vmatpush1.bf16.msra.mxu0 %v1234
    %1444 = vmatprep.subr.bf16.mxu0 %v1243
    %1445 = vmatpush1.bf16.msra.mxu0 %v1242
    %1446 = vmatprep.subr.bf16.mxu0 %v1251
    %1447 = vmatpush1.bf16.msra.mxu0 %v1250
    %1448 = vmatprep.subr.bf16.mxu0 %v1259
    %1449 = vmatpush1.bf16.msra.mxu0 %v1258
    %1450 = vmatprep.subr.bf16.mxu0 %v1267
    %1451 = vmatpush1.bf16.msra.mxu0 %v1266
    %1452 = vmatprep.subr.bf16.mxu0 %v1275
    %1453 = vmatpush1.bf16.msra.mxu0 %v1274
    %1454 = vmatprep.subr.bf16.mxu0 %v1283
    %1455 = vmatpush1.bf16.msra.mxu0 %v1282
    %1456 = vmatprep.subr.bf16.mxu0 %v1291
    %1457 = vmatpush1.bf16.msra.mxu0 %v1290
    %1458 = vmatprep.mubr.bf16.mxu0 %v1167
    %1459 = vmatmul.mubr.bf16.gmra.mrb[0].mxu0 %v1166
    %v1460 = vpop.f32.mrb[0].mxu0
    %v1461 = vadd.f32 0.0, %v1460
    %v1462 = vpop.f32.mrb[0].mxu0
    %v1463 = vadd.f32 0.0, %v1462
    %v1464 = vpop.f32.mrb[0].mxu0
    %v1465 = vpop.f32.mrb[0].mxu0
    %1466 = vdwg.mxu0
    %1467 = vmatprep.subr.bf16.mxu0 %v1299
    %1468 = vmatpush1.bf16.msra.mxu0 %v1298
    %1469 = vmatprep.subr.bf16.mxu0 %v1307
    %1470 = vmatpush1.bf16.msra.mxu0 %v1306
    %1471 = vmatprep.subr.bf16.mxu0 %v1315
    %1472 = vmatpush1.bf16.msra.mxu0 %v1314
    %1473 = vmatprep.subr.bf16.mxu0 %v1323
    %1474 = vmatpush1.bf16.msra.mxu0 %v1322
    %1475 = vmatprep.subr.bf16.mxu0 %v1331
    %1476 = vmatpush1.bf16.msra.mxu0 %v1330
    %1477 = vmatprep.subr.bf16.mxu0 %v1339
    %1478 = vmatpush1.bf16.msra.mxu0 %v1338
    %1479 = vmatprep.subr.bf16.mxu0 %v1347
    %1480 = vmatpush1.bf16.msra.mxu0 %v1346
    %1481 = vmatprep.subr.bf16.mxu0 %v1355
    %1482 = vmatpush1.bf16.msra.mxu0 %v1354
    %1483 = vmatprep.subr.bf16.mxu0 %v1363
    %1484 = vmatpush1.bf16.msra.mxu0 %v1362
    %1485 = vmatprep.subr.bf16.mxu0 %v1371
    %1486 = vmatpush1.bf16.msra.mxu0 %v1370
    %1487 = vmatprep.subr.bf16.mxu0 %v1379
    %1488 = vmatpush1.bf16.msra.mxu0 %v1378
    %1489 = vmatprep.subr.bf16.mxu0 %v1387
    %1490 = vmatpush1.bf16.msra.mxu0 %v1386
    %1491 = vmatprep.subr.bf16.mxu0 %v1395
    %1492 = vmatpush1.bf16.msra.mxu0 %v1394
    %1493 = vmatprep.subr.bf16.mxu0 %v1403
    %1494 = vmatpush1.bf16.msra.mxu0 %v1402
    %1495 = vmatprep.subr.bf16.mxu0 %v1411
    %1496 = vmatpush1.bf16.msra.mxu0 %v1410
    %1497 = vmatprep.subr.bf16.mxu0 %v1419
    %1498 = vmatpush1.bf16.msra.mxu0 %v1418
    %1499 = vmatprep.mubr.bf16.mxu0 %v1169
    %1500 = vmatmul.mubr.bf16.gmra.mrb[0].mxu0 %v1168
    %v1501 = vpop.f32.mrb[0].mxu0
    %v1502 = vadd.f32 %v1461, %v1501
    %v1503 = vpop.f32.mrb[0].mxu0
    %v1504 = vadd.f32 %v1463, %v1503
    %v1505 = vpop.f32.mrb[0].mxu0
    %v1506 = vpop.f32.mrb[0].mxu0
    %1507 = vdwg.mxu0
    %1508 = vmatprep.subr.bf16.mxu0 %v1173
    %1509 = vmatpush1.bf16.msra.mxu0 %v1172
    %1510 = vmatprep.subr.bf16.mxu0 %v1181
    %1511 = vmatpush1.bf16.msra.mxu0 %v1180
    %1512 = vmatprep.subr.bf16.mxu0 %v1189
    %1513 = vmatpush1.bf16.msra.mxu0 %v1188
    %1514 = vmatprep.subr.bf16.mxu0 %v1197
    %1515 = vmatpush1.bf16.msra.mxu0 %v1196
    %1516 = vmatprep.subr.bf16.mxu0 %v1205
    %1517 = vmatpush1.bf16.msra.mxu0 %v1204
    %1518 = vmatprep.subr.bf16.mxu0 %v1213
    %1519 = vmatpush1.bf16.msra.mxu0 %v1212
    %1520 = vmatprep.subr.bf16.mxu0 %v1221
    %1521 = vmatpush1.bf16.msra.mxu0 %v1220
    %1522 = vmatprep.subr.bf16.mxu0 %v1229
    %1523 = vmatpush1.bf16.msra.mxu0 %v1228
    %1524 = vmatprep.subr.bf16.mxu0 %v1237
    %1525 = vmatpush1.bf16.msra.mxu0 %v1236
    %1526 = vmatprep.subr.bf16.mxu0 %v1245
    %1527 = vmatpush1.bf16.msra.mxu0 %v1244
    %1528 = vmatprep.subr.bf16.mxu0 %v1253
    %1529 = vmatpush1.bf16.msra.mxu0 %v1252
    %1530 = vmatprep.subr.bf16.mxu0 %v1261
    %1531 = vmatpush1.bf16.msra.mxu0 %v1260
    %1532 = vmatprep.subr.bf16.mxu0 %v1269
    %1533 = vmatpush1.bf16.msra.mxu0 %v1268
    %1534 = vmatprep.subr.bf16.mxu0 %v1277
    %1535 = vmatpush1.bf16.msra.mxu0 %v1276
    %1536 = vmatprep.subr.bf16.mxu0 %v1285
    %1537 = vmatpush1.bf16.msra.mxu0 %v1284
    %1538 = vmatprep.subr.bf16.mxu0 %v1293
    %1539 = vmatpush1.bf16.msra.mxu0 %v1292
    %1540 = vmatprep.mubr.bf16.mxu0 %v1167
    %1541 = vmatmul.mubr.bf16.gmra.mrb[0].mxu0 %v1166
    %v1542 = vpop.f32.mrb[0].mxu0
    %v1543 = vadd.f32 0.0, %v1542
    %v1544 = vpop.f32.mrb[0].mxu0
    %v1545 = vadd.f32 0.0, %v1544
    %v1546 = vpop.f32.mrb[0].mxu0
    %v1547 = vpop.f32.mrb[0].mxu0
    %1548 = vdwg.mxu0
    %1549 = vmatprep.subr.bf16.mxu0 %v1301
    %1550 = vmatpush1.bf16.msra.mxu0 %v1300
    %1551 = vmatprep.subr.bf16.mxu0 %v1309
    %1552 = vmatpush1.bf16.msra.mxu0 %v1308
    %1553 = vmatprep.subr.bf16.mxu0 %v1317
    %1554 = vmatpush1.bf16.msra.mxu0 %v1316
    %1555 = vmatprep.subr.bf16.mxu0 %v1325
    %1556 = vmatpush1.bf16.msra.mxu0 %v1324
    %1557 = vmatprep.subr.bf16.mxu0 %v1333
    %1558 = vmatpush1.bf16.msra.mxu0 %v1332
    %1559 = vmatprep.subr.bf16.mxu0 %v1341
    %1560 = vmatpush1.bf16.msra.mxu0 %v1340
    %1561 = vmatprep.subr.bf16.mxu0 %v1349
    %1562 = vmatpush1.bf16.msra.mxu0 %v1348
    %1563 = vmatprep.subr.bf16.mxu0 %v1357
    %1564 = vmatpush1.bf16.msra.mxu0 %v1356
    %1565 = vmatprep.subr.bf16.mxu0 %v1365
    %1566 = vmatpush1.bf16.msra.mxu0 %v1364
    %1567 = vmatprep.subr.bf16.mxu0 %v1373
    %1568 = vmatpush1.bf16.msra.mxu0 %v1372
    %1569 = vmatprep.subr.bf16.mxu0 %v1381
    %1570 = vmatpush1.bf16.msra.mxu0 %v1380
    %1571 = vmatprep.subr.bf16.mxu0 %v1389
    %1572 = vmatpush1.bf16.msra.mxu0 %v1388
    %1573 = vmatprep.subr.bf16.mxu0 %v1397
    %1574 = vmatpush1.bf16.msra.mxu0 %v1396
    %1575 = vmatprep.subr.bf16.mxu0 %v1405
    %1576 = vmatpush1.bf16.msra.mxu0 %v1404
    %1577 = vmatprep.subr.bf16.mxu0 %v1413
    %1578 = vmatpush1.bf16.msra.mxu0 %v1412
    %1579 = vmatprep.subr.bf16.mxu0 %v1421
    %1580 = vmatpush1.bf16.msra.mxu0 %v1420
    %1581 = vmatprep.mubr.bf16.mxu0 %v1169
    %1582 = vmatmul.mubr.bf16.gmra.mrb[0].mxu0 %v1168
    %v1583 = vpop.f32.mrb[0].mxu0
    %v1584 = vadd.f32 %v1543, %v1583
    %v1585 = vpop.f32.mrb[0].mxu0
    %v1586 = vadd.f32 %v1545, %v1585
    %v1587 = vpop.f32.mrb[0].mxu0
    %v1588 = vpop.f32.mrb[0].mxu0
    %1589 = vdwg.mxu0
    %1590 = vmatprep.subr.bf16.mxu0 %v1175
    %1591 = vmatpush1.bf16.msra.mxu0 %v1174
    %1592 = vmatprep.subr.bf16.mxu0 %v1183
    %1593 = vmatpush1.bf16.msra.mxu0 %v1182
    %1594 = vmatprep.subr.bf16.mxu0 %v1191
    %1595 = vmatpush1.bf16.msra.mxu0 %v1190
    %1596 = vmatprep.subr.bf16.mxu0 %v1199
    %1597 = vmatpush1.bf16.msra.mxu0 %v1198
    %1598 = vmatprep.subr.bf16.mxu0 %v1207
    %1599 = vmatpush1.bf16.msra.mxu0 %v1206
    %1600 = vmatprep.subr.bf16.mxu0 %v1215
    %1601 = vmatpush1.bf16.msra.mxu0 %v1214
    %1602 = vmatprep.subr.bf16.mxu0 %v1223
    %1603 = vmatpush1.bf16.msra.mxu0 %v1222
    %1604 = vmatprep.subr.bf16.mxu0 %v1231
    %1605 = vmatpush1.bf16.msra.mxu0 %v1230
    %1606 = vmatprep.subr.bf16.mxu0 %v1239
    %1607 = vmatpush1.bf16.msra.mxu0 %v1238
    %1608 = vmatprep.subr.bf16.mxu0 %v1247
    %1609 = vmatpush1.bf16.msra.mxu0 %v1246
    %1610 = vmatprep.subr.bf16.mxu0 %v1255
    %1611 = vmatpush1.bf16.msra.mxu0 %v1254
    %1612 = vmatprep.subr.bf16.mxu0 %v1263
    %1613 = vmatpush1.bf16.msra.mxu0 %v1262
    %1614 = vmatprep.subr.bf16.mxu0 %v1271
    %1615 = vmatpush1.bf16.msra.mxu0 %v1270
    %1616 = vmatprep.subr.bf16.mxu0 %v1279
    %1617 = vmatpush1.bf16.msra.mxu0 %v1278
    %1618 = vmatprep.subr.bf16.mxu0 %v1287
    %1619 = vmatpush1.bf16.msra.mxu0 %v1286
    %1620 = vmatprep.subr.bf16.mxu0 %v1295
    %1621 = vmatpush1.bf16.msra.mxu0 %v1294
    %1622 = vmatprep.mubr.bf16.mxu0 %v1167
    %1623 = vmatmul.mubr.bf16.gmra.mrb[0].mxu0 %v1166
    %v1624 = vpop.f32.mrb[0].mxu0
    %v1625 = vadd.f32 0.0, %v1624
    %v1626 = vpop.f32.mrb[0].mxu0
    %v1627 = vadd.f32 0.0, %v1626
    %v1628 = vpop.f32.mrb[0].mxu0
    %v1629 = vpop.f32.mrb[0].mxu0
    %1630 = vdwg.mxu0
    %1631 = vmatprep.subr.bf16.mxu0 %v1303
    %1632 = vmatpush1.bf16.msra.mxu0 %v1302
    %1633 = vmatprep.subr.bf16.mxu0 %v1311
    %1634 = vmatpush1.bf16.msra.mxu0 %v1310
    %1635 = vmatprep.subr.bf16.mxu0 %v1319
    %1636 = vmatpush1.bf16.msra.mxu0 %v1318
    %1637 = vmatprep.subr.bf16.mxu0 %v1327
    %1638 = vmatpush1.bf16.msra.mxu0 %v1326
    %1639 = vmatprep.subr.bf16.mxu0 %v1335
    %1640 = vmatpush1.bf16.msra.mxu0 %v1334
    %1641 = vmatprep.subr.bf16.mxu0 %v1343
    %1642 = vmatpush1.bf16.msra.mxu0 %v1342
    %1643 = vmatprep.subr.bf16.mxu0 %v1351
    %1644 = vmatpush1.bf16.msra.mxu0 %v1350
    %1645 = vmatprep.subr.bf16.mxu0 %v1359
    %1646 = vmatpush1.bf16.msra.mxu0 %v1358
    %1647 = vmatprep.subr.bf16.mxu0 %v1367
    %1648 = vmatpush1.bf16.msra.mxu0 %v1366
    %1649 = vmatprep.subr.bf16.mxu0 %v1375
    %1650 = vmatpush1.bf16.msra.mxu0 %v1374
    %1651 = vmatprep.subr.bf16.mxu0 %v1383
    %1652 = vmatpush1.bf16.msra.mxu0 %v1382
    %1653 = vmatprep.subr.bf16.mxu0 %v1391
    %1654 = vmatpush1.bf16.msra.mxu0 %v1390
    %1655 = vmatprep.subr.bf16.mxu0 %v1399
    %1656 = vmatpush1.bf16.msra.mxu0 %v1398
    %1657 = vmatprep.subr.bf16.mxu0 %v1407
    %1658 = vmatpush1.bf16.msra.mxu0 %v1406
    %1659 = vmatprep.subr.bf16.mxu0 %v1415
    %1660 = vmatpush1.bf16.msra.mxu0 %v1414
    %1661 = vmatprep.subr.bf16.mxu0 %v1423
    %1662 = vmatpush1.bf16.msra.mxu0 %v1422
    %1663 = vmatprep.mubr.bf16.mxu0 %v1169
    %1664 = vmatmul.mubr.bf16.gmra.mrb[0].mxu0 %v1168
    %v1665 = vpop.f32.mrb[0].mxu0
    %v1666 = vadd.f32 %v1625, %v1665
    %v1667 = vpop.f32.mrb[0].mxu0
    %v1668 = vadd.f32 %v1627, %v1667
    %v1669 = vpop.f32.mrb[0].mxu0
    %v1670 = vpop.f32.mrb[0].mxu0
    %1671 = vdwg.mxu0
    %1672 = vmatprep.subr.bf16.mxu0 %v1177
    %1673 = vmatpush1.bf16.msra.mxu0 %v1176
    %1674 = vmatprep.subr.bf16.mxu0 %v1185
    %1675 = vmatpush1.bf16.msra.mxu0 %v1184
    %1676 = vmatprep.subr.bf16.mxu0 %v1193
    %1677 = vmatpush1.bf16.msra.mxu0 %v1192
    %1678 = vmatprep.subr.bf16.mxu0 %v1201
    %1679 = vmatpush1.bf16.msra.mxu0 %v1200
    %1680 = vmatprep.subr.bf16.mxu0 %v1209
    %1681 = vmatpush1.bf16.msra.mxu0 %v1208
    %1682 = vmatprep.subr.bf16.mxu0 %v1217
    %1683 = vmatpush1.bf16.msra.mxu0 %v1216
    %1684 = vmatprep.subr.bf16.mxu0 %v1225
    %1685 = vmatpush1.bf16.msra.mxu0 %v1224
    %1686 = vmatprep.subr.bf16.mxu0 %v1233
    %1687 = vmatpush1.bf16.msra.mxu0 %v1232
    %1688 = vmatprep.subr.bf16.mxu0 %v1241
    %1689 = vmatpush1.bf16.msra.mxu0 %v1240
    %1690 = vmatprep.subr.bf16.mxu0 %v1249
    %1691 = vmatpush1.bf16.msra.mxu0 %v1248
    %1692 = vmatprep.subr.bf16.mxu0 %v1257
    %1693 = vmatpush1.bf16.msra.mxu0 %v1256
    %1694 = vmatprep.subr.bf16.mxu0 %v1265
    %1695 = vmatpush1.bf16.msra.mxu0 %v1264
    %1696 = vmatprep.subr.bf16.mxu0 %v1273
    %1697 = vmatpush1.bf16.msra.mxu0 %v1272
    %1698 = vmatprep.subr.bf16.mxu0 %v1281
    %1699 = vmatpush1.bf16.msra.mxu0 %v1280
    %1700 = vmatprep.subr.bf16.mxu0 %v1289
    %1701 = vmatpush1.bf16.msra.mxu0 %v1288
    %1702 = vmatprep.subr.bf16.mxu0 %v1297
    %1703 = vmatpush1.bf16.msra.mxu0 %v1296
    %1704 = vmatprep.mubr.bf16.mxu0 %v1167
    %1705 = vmatmul.mubr.bf16.gmra.mrb[0].mxu0 %v1166
    %v1706 = vpop.f32.mrb[0].mxu0
    %v1707 = vadd.f32 0.0, %v1706
    %v1708 = vpop.f32.mrb[0].mxu0
    %v1709 = vadd.f32 0.0, %v1708
    %v1710 = vpop.f32.mrb[0].mxu0
    %v1711 = vpop.f32.mrb[0].mxu0
    %1712 = vdwg.mxu0
    %1713 = vmatprep.subr.bf16.mxu0 %v1305
    %1714 = vmatpush1.bf16.msra.mxu0 %v1304
    %1715 = vmatprep.subr.bf16.mxu0 %v1313
    %1716 = vmatpush1.bf16.msra.mxu0 %v1312
    %1717 = vmatprep.subr.bf16.mxu0 %v1321
    %1718 = vmatpush1.bf16.msra.mxu0 %v1320
    %1719 = vmatprep.subr.bf16.mxu0 %v1329
    %1720 = vmatpush1.bf16.msra.mxu0 %v1328
    %1721 = vmatprep.subr.bf16.mxu0 %v1337
    %1722 = vmatpush1.bf16.msra.mxu0 %v1336
    %1723 = vmatprep.subr.bf16.mxu0 %v1345
    %1724 = vmatpush1.bf16.msra.mxu0 %v1344
    %1725 = vmatprep.subr.bf16.mxu0 %v1353
    %1726 = vmatpush1.bf16.msra.mxu0 %v1352
    %1727 = vmatprep.subr.bf16.mxu0 %v1361
    %1728 = vmatpush1.bf16.msra.mxu0 %v1360
    %1729 = vmatprep.subr.bf16.mxu0 %v1369
    %1730 = vmatpush1.bf16.msra.mxu0 %v1368
    %1731 = vmatprep.subr.bf16.mxu0 %v1377
    %1732 = vmatpush1.bf16.msra.mxu0 %v1376
    %1733 = vmatprep.subr.bf16.mxu0 %v1385
    %1734 = vmatpush1.bf16.msra.mxu0 %v1384
    %1735 = vmatprep.subr.bf16.mxu0 %v1393
    %1736 = vmatpush1.bf16.msra.mxu0 %v1392
    %1737 = vmatprep.subr.bf16.mxu0 %v1401
    %1738 = vmatpush1.bf16.msra.mxu0 %v1400
    %1739 = vmatprep.subr.bf16.mxu0 %v1409
    %1740 = vmatpush1.bf16.msra.mxu0 %v1408
    %1741 = vmatprep.subr.bf16.mxu0 %v1417
    %1742 = vmatpush1.bf16.msra.mxu0 %v1416
    %1743 = vmatprep.subr.bf16.mxu0 %v1425
    %1744 = vmatpush1.bf16.msra.mxu0 %v1424
    %1745 = vmatprep.mubr.bf16.mxu0 %v1169
    %1746 = vmatmul.mubr.bf16.gmra.mrb[0].mxu0 %v1168
    %v1747 = vpop.f32.mrb[0].mxu0
    %v1748 = vadd.f32 %v1707, %v1747
    %v1749 = vpop.f32.mrb[0].mxu0
    %v1750 = vadd.f32 %v1709, %v1749
    %v1751 = vpop.f32.mrb[0].mxu0
    %v1752 = vpop.f32.mrb[0].mxu0
    %1753 = vdwg.mxu0
    %v1754 = vrot.slane %v1502, 4
    %v1755 = vadd.f32 %v1502, %v1754
    %v1756 = vrot.slane %v1755, 2
    %v1757 = vadd.f32 %v1755, %v1756
    %v1758 = vrot.slane %v1757, 1
    %v1759 = vadd.f32 %v1757, %v1758
    %v1760 = vrot.slane %v1504, 4
    %v1761 = vadd.f32 %v1504, %v1760
    %v1762 = vrot.slane %v1761, 2
    %v1763 = vadd.f32 %v1761, %v1762
    %v1764 = vrot.slane %v1763, 1
    %v1765 = vadd.f32 %v1763, %v1764
    %v1766 = vrot.slane %v1584, 4
    %v1767 = vadd.f32 %v1584, %v1766
    %v1768 = vrot.slane %v1767, 2
    %v1769 = vadd.f32 %v1767, %v1768
    %v1770 = vrot.slane %v1769, 1
    %v1771 = vadd.f32 %v1769, %v1770
    %v1772 = vrot.slane %v1586, 4
    %v1773 = vadd.f32 %v1586, %v1772
    %v1774 = vrot.slane %v1773, 2
    %v1775 = vadd.f32 %v1773, %v1774
    %v1776 = vrot.slane %v1775, 1
    %v1777 = vadd.f32 %v1775, %v1776
    %v1778 = vrot.slane %v1666, 4
    %v1779 = vadd.f32 %v1666, %v1778
    %v1780 = vrot.slane %v1779, 2
    %v1781 = vadd.f32 %v1779, %v1780
    %v1782 = vrot.slane %v1781, 1
    %v1783 = vadd.f32 %v1781, %v1782
    %v1784 = vrot.slane %v1668, 4
    %v1785 = vadd.f32 %v1668, %v1784
    %v1786 = vrot.slane %v1785, 2
    %v1787 = vadd.f32 %v1785, %v1786
    %v1788 = vrot.slane %v1787, 1
    %v1789 = vadd.f32 %v1787, %v1788
    %v1790 = vrot.slane %v1748, 4
    %v1791 = vadd.f32 %v1748, %v1790
    %v1792 = vrot.slane %v1791, 2
    %v1793 = vadd.f32 %v1791, %v1792
    %v1794 = vrot.slane %v1793, 1
    %v1795 = vadd.f32 %v1793, %v1794
    %v1796 = vrot.slane %v1750, 4
    %v1797 = vadd.f32 %v1750, %v1796
    %v1798 = vrot.slane %v1797, 2
    %v1799 = vadd.f32 %v1797, %v1798
    %v1800 = vrot.slane %v1799, 1
    %v1801 = vadd.f32 %v1799, %v1800
    %v1802 = vmul.f32 %v1759, 0.125
    %v1803 = vmul.f32 %v1765, 0.125
    %v1804 = vmul.f32 %v1771, 0.125
    %v1805 = vmul.f32 %v1777, 0.125
    %v1806 = vmul.f32 %v1783, 0.125
    %v1807 = vmul.f32 %v1789, 0.125
    %v1808 = vmul.f32 %v1795, 0.125
    %v1809 = vmul.f32 %v1801, 0.125
    %v1810 = vmul.f32 %v1502, %v1502
    %v1811 = vmul.f32 %v1504, %v1504
    %v1812 = vmul.f32 %v1584, %v1584
    %v1813 = vmul.f32 %v1586, %v1586
    %v1814 = vmul.f32 %v1666, %v1666
    %v1815 = vmul.f32 %v1668, %v1668
    %v1816 = vmul.f32 %v1748, %v1748
    %v1817 = vmul.f32 %v1750, %v1750
    %v1818 = vrot.slane %v1810, 4
    %v1819 = vadd.f32 %v1810, %v1818
    %v1820 = vrot.slane %v1819, 2
    %v1821 = vadd.f32 %v1819, %v1820
    %v1822 = vrot.slane %v1821, 1
    %v1823 = vadd.f32 %v1821, %v1822
    %v1824 = vrot.slane %v1811, 4
    %v1825 = vadd.f32 %v1811, %v1824
    %v1826 = vrot.slane %v1825, 2
    %v1827 = vadd.f32 %v1825, %v1826
    %v1828 = vrot.slane %v1827, 1
    %v1829 = vadd.f32 %v1827, %v1828
    %v1830 = vrot.slane %v1812, 4
    %v1831 = vadd.f32 %v1812, %v1830
    %v1832 = vrot.slane %v1831, 2
    %v1833 = vadd.f32 %v1831, %v1832
    %v1834 = vrot.slane %v1833, 1
    %v1835 = vadd.f32 %v1833, %v1834
    %v1836 = vrot.slane %v1813, 4
    %v1837 = vadd.f32 %v1813, %v1836
    %v1838 = vrot.slane %v1837, 2
    %v1839 = vadd.f32 %v1837, %v1838
    %v1840 = vrot.slane %v1839, 1
    %v1841 = vadd.f32 %v1839, %v1840
    %v1842 = vrot.slane %v1814, 4
    %v1843 = vadd.f32 %v1814, %v1842
    %v1844 = vrot.slane %v1843, 2
    %v1845 = vadd.f32 %v1843, %v1844
    %v1846 = vrot.slane %v1845, 1
    %v1847 = vadd.f32 %v1845, %v1846
    %v1848 = vrot.slane %v1815, 4
    %v1849 = vadd.f32 %v1815, %v1848
    %v1850 = vrot.slane %v1849, 2
    %v1851 = vadd.f32 %v1849, %v1850
    %v1852 = vrot.slane %v1851, 1
    %v1853 = vadd.f32 %v1851, %v1852
    %v1854 = vrot.slane %v1816, 4
    %v1855 = vadd.f32 %v1816, %v1854
    %v1856 = vrot.slane %v1855, 2
    %v1857 = vadd.f32 %v1855, %v1856
    %v1858 = vrot.slane %v1857, 1
    %v1859 = vadd.f32 %v1857, %v1858
    %v1860 = vrot.slane %v1817, 4
    %v1861 = vadd.f32 %v1817, %v1860
    %v1862 = vrot.slane %v1861, 2
    %v1863 = vadd.f32 %v1861, %v1862
    %v1864 = vrot.slane %v1863, 1
    %v1865 = vadd.f32 %v1863, %v1864
    %v1866 = vmul.f32 %v1823, 0.125
    %v1867 = vmul.f32 %v1829, 0.125
    %v1868 = vmul.f32 %v1835, 0.125
    %v1869 = vmul.f32 %v1841, 0.125
    %v1870 = vmul.f32 %v1847, 0.125
    %v1871 = vmul.f32 %v1853, 0.125
    %v1872 = vmul.f32 %v1859, 0.125
    %v1873 = vmul.f32 %v1865, 0.125
    %v1874 = vmul.f32 %v1802, %v1802
    %v1875 = vmul.f32 %v1803, %v1803
    %v1876 = vmul.f32 %v1804, %v1804
    %v1877 = vmul.f32 %v1805, %v1805
    %v1878 = vmul.f32 %v1806, %v1806
    %v1879 = vmul.f32 %v1807, %v1807
    %v1880 = vmul.f32 %v1808, %v1808
    %v1881 = vmul.f32 %v1809, %v1809
    %v1882 = vsub.f32 %v1866, %v1874
    %v1883 = vsub.f32 %v1867, %v1875
    %v1884 = vsub.f32 %v1868, %v1876
    %v1885 = vsub.f32 %v1869, %v1877
    %v1886 = vsub.f32 %v1870, %v1878
    %v1887 = vsub.f32 %v1871, %v1879
    %v1888 = vsub.f32 %v1872, %v1880
    %v1889 = vsub.f32 %v1873, %v1881
    %v1890 = vadd.f32 %v1882, 0.8
    %v1891 = vadd.f32 %v1883, 0.8
    %v1892 = vadd.f32 %v1884, 0.8
    %v1893 = vadd.f32 %v1885, 0.8
    %v1894 = vadd.f32 %v1886, 0.8
    %v1895 = vadd.f32 %v1887, 0.8
    %v1896 = vadd.f32 %v1888, 0.8
    %v1897 = vadd.f32 %v1889, 0.8
    %v1898 = vrsqrt.pop %v1890
    %v1899 = vrsqrt.pop %v1891
    %v1900 = vrsqrt.pop %v1892
    %v1901 = vrsqrt.pop %v1893
    %v1902 = vrsqrt.pop %v1894
    %v1903 = vrsqrt.pop %v1895
    %v1904 = vrsqrt.pop %v1896
    %v1905 = vrsqrt.pop %v1897
    %v1914 = vcombine.low %v1898, %v1899
    %v1915 = vcombine.low %v1900, %v1901
    %v1916 = vcombine.low %v1902, %v1903
    %v1917 = vcombine.low %v1904, %v1905
    %v1919 = vunpack.c.l.s4 1966171168
    %v1920 = vunpack.c.0.s8 %v1919
    %v1921 = vlaneseq
    %v1922 = vshrl.u32 %v1921, 7
    %v1923 = vsub.s32 %v1920, %v1922
    %v1924 = vrot.slane %v1914, %v1923
    %v1926 = vunpack.c.l.s4 1966171168
    %v1927 = vunpack.c.0.s8 %v1926
    %v1928 = vlaneseq
    %v1929 = vshrl.u32 %v1928, 7
    %v1930 = vsub.s32 %v1927, %v1929
    %v1931 = vrot.slane %v1915, %v1930
    %v1933 = vunpack.c.l.s4 1966171168
    %v1934 = vunpack.c.0.s8 %v1933
    %v1935 = vlaneseq
    %v1936 = vshrl.u32 %v1935, 7
    %v1937 = vsub.s32 %v1934, %v1936
    %v1938 = vrot.slane %v1916, %v1937
    %v1940 = vunpack.c.l.s4 1966171168
    %v1941 = vunpack.c.0.s8 %v1940
    %v1942 = vlaneseq
    %v1943 = vshrl.u32 %v1942, 7
    %v1944 = vsub.s32 %v1941, %v1943
    %v1945 = vrot.slane %v1917, %v1944
    %v1946 = vcombine.low %v1924, %v1931
    %v1947 = vcombine.low %v1938, %v1945
    %v1949 = vunpack.c.l.s4 1966171168
    %v1950 = vunpack.c.0.s8 %v1949
    %v1951 = vlaneseq
    %v1952 = vshrl.u32 %v1951, 7
    %v1953 = vsub.s32 %v1950, %v1952
    %v1954 = vrot.slane %v1946, %v1953
    %v1956 = vunpack.c.l.s4 1966171168
    %v1957 = vunpack.c.0.s8 %v1956
    %v1958 = vlaneseq
    %v1959 = vshrl.u32 %v1958, 7
    %v1960 = vsub.s32 %v1957, %v1959
    %v1961 = vrot.slane %v1947, %v1960
    %v1962 = vcombine.low %v1954, %v1961
    %v1964 = vmul.f32 %v136, %v1962
    %v1966 = vlaneseq
    %v1967 = vshrl.u32 %v1966, 7
    %v1968 = vsub.s32 0, %v1967
    %v1969 = vrot.slane %v1964, %v1968
    %v1970 = vlaneseq
    %v1971 = vshrl.u32 %v1970, 7
    %v1972 = vsub.s32 1, %v1971
    %v1973 = vrot.slane %v1964, %v1972
    %v1974 = vlaneseq
    %v1975 = vshrl.u32 %v1974, 7
    %v1976 = vsub.s32 2, %v1975
    %v1977 = vrot.slane %v1964, %v1976
    %v1978 = vlaneseq
    %v1979 = vshrl.u32 %v1978, 7
    %v1980 = vsub.s32 3, %v1979
    %v1981 = vrot.slane %v1964, %v1980
    %v1982 = vlaneseq
    %v1983 = vshrl.u32 %v1982, 7
    %v1984 = vsub.s32 4, %v1983
    %v1985 = vrot.slane %v1964, %v1984
    %v1986 = vlaneseq
    %v1987 = vshrl.u32 %v1986, 7
    %v1988 = vsub.s32 5, %v1987
    %v1989 = vrot.slane %v1964, %v1988
    %v1990 = vlaneseq
    %v1991 = vshrl.u32 %v1990, 7
    %v1992 = vsub.s32 6, %v1991
    %v1993 = vrot.slane %v1964, %v1992
    %v1994 = vlaneseq
    %v1995 = vshrl.u32 %v1994, 7
    %v1996 = vsub.s32 7, %v1995
    %v1997 = vrot.slane %v1964, %v1996
    %v2006 = vmul.f32 %v1802, %v1969
    %v2007 = vmul.f32 %v1803, %v1973
    %v2008 = vmul.f32 %v1804, %v1977
    %v2009 = vmul.f32 %v1805, %v1981
    %v2010 = vmul.f32 %v1806, %v1985
    %v2011 = vmul.f32 %v1807, %v1989
    %v2012 = vmul.f32 %v1808, %v1993
    %v2013 = vmul.f32 %v1809, %v1997
    %v2022 = vcombine.low %v2006, %v2007
    %v2023 = vcombine.low %v2008, %v2009
    %v2024 = vcombine.low %v2010, %v2011
    %v2025 = vcombine.low %v2012, %v2013
    %v2027 = vunpack.c.l.s4 1966171168
    %v2028 = vunpack.c.0.s8 %v2027
    %v2029 = vlaneseq
    %v2030 = vshrl.u32 %v2029, 7
    %v2031 = vsub.s32 %v2028, %v2030
    %v2032 = vrot.slane %v2022, %v2031
    %v2034 = vunpack.c.l.s4 1966171168
    %v2035 = vunpack.c.0.s8 %v2034
    %v2036 = vlaneseq
    %v2037 = vshrl.u32 %v2036, 7
    %v2038 = vsub.s32 %v2035, %v2037
    %v2039 = vrot.slane %v2023, %v2038
    %v2041 = vunpack.c.l.s4 1966171168
    %v2042 = vunpack.c.0.s8 %v2041
    %v2043 = vlaneseq
    %v2044 = vshrl.u32 %v2043, 7
    %v2045 = vsub.s32 %v2042, %v2044
    %v2046 = vrot.slane %v2024, %v2045
    %v2048 = vunpack.c.l.s4 1966171168
    %v2049 = vunpack.c.0.s8 %v2048
    %v2050 = vlaneseq
    %v2051 = vshrl.u32 %v2050, 7
    %v2052 = vsub.s32 %v2049, %v2051
    %v2053 = vrot.slane %v2025, %v2052
    %v2054 = vcombine.low %v2032, %v2039
    %v2055 = vcombine.low %v2046, %v2053
    %v2057 = vunpack.c.l.s4 1966171168
    %v2058 = vunpack.c.0.s8 %v2057
    %v2059 = vlaneseq
    %v2060 = vshrl.u32 %v2059, 7
    %v2061 = vsub.s32 %v2058, %v2060
    %v2062 = vrot.slane %v2054, %v2061
    %v2064 = vunpack.c.l.s4 1966171168
    %v2065 = vunpack.c.0.s8 %v2064
    %v2066 = vlaneseq
    %v2067 = vshrl.u32 %v2066, 7
    %v2068 = vsub.s32 %v2065, %v2067
    %v2069 = vrot.slane %v2055, %v2068
    %v2070 = vcombine.low %v2062, %v2069
    %v2072 = vsub.f32 %v140, %v2070
    %v2073 = vmul.f32 %v1502, %v1969
    %v2074 = vmul.f32 %v1504, %v1973
    %v2075 = vmul.f32 %v1584, %v1977
    %v2076 = vmul.f32 %v1586, %v1981
    %v2077 = vmul.f32 %v1666, %v1985
    %v2078 = vmul.f32 %v1668, %v1989
    %v2079 = vmul.f32 %v1748, %v1993
    %v2080 = vmul.f32 %v1750, %v1997
    %v2082 = vlaneseq
    %v2083 = vshrl.u32 %v2082, 7
    %v2084 = vsub.s32 0, %v2083
    %v2085 = vrot.slane %v2072, %v2084
    %v2086 = vlaneseq
    %v2087 = vshrl.u32 %v2086, 7
    %v2088 = vsub.s32 1, %v2087
    %v2089 = vrot.slane %v2072, %v2088
    %v2090 = vlaneseq
    %v2091 = vshrl.u32 %v2090, 7
    %v2092 = vsub.s32 2, %v2091
    %v2093 = vrot.slane %v2072, %v2092
    %v2094 = vlaneseq
    %v2095 = vshrl.u32 %v2094, 7
    %v2096 = vsub.s32 3, %v2095
    %v2097 = vrot.slane %v2072, %v2096
    %v2098 = vlaneseq
    %v2099 = vshrl.u32 %v2098, 7
    %v2100 = vsub.s32 4, %v2099
    %v2101 = vrot.slane %v2072, %v2100
    %v2102 = vlaneseq
    %v2103 = vshrl.u32 %v2102, 7
    %v2104 = vsub.s32 5, %v2103
    %v2105 = vrot.slane %v2072, %v2104
    %v2106 = vlaneseq
    %v2107 = vshrl.u32 %v2106, 7
    %v2108 = vsub.s32 6, %v2107
    %v2109 = vrot.slane %v2072, %v2108
    %v2110 = vlaneseq
    %v2111 = vshrl.u32 %v2110, 7
    %v2112 = vsub.s32 7, %v2111
    %v2113 = vrot.slane %v2072, %v2112
    %v2122 = vadd.f32 %v2073, %v2085
    %v2123 = vadd.f32 %v2074, %v2089
    %v2124 = vadd.f32 %v2075, %v2093
    %v2125 = vadd.f32 %v2076, %v2097
    %v2126 = vadd.f32 %v2077, %v2101
    %v2127 = vadd.f32 %v2078, %v2105
    %v2128 = vadd.f32 %v2079, %v2109
    %v2129 = vadd.f32 %v2080, %v2113
    %v2130 = vmul.f32 %v2122, 0.2
    %v2131 = vmul.f32 %v2123, 0.2
    %v2132 = vmul.f32 %v2124, 0.2
    %v2133 = vmul.f32 %v2125, 0.2
    %v2134 = vmul.f32 %v2126, 0.2
    %v2135 = vmul.f32 %v2127, 0.2
    %v2136 = vmul.f32 %v2128, 0.2
    %v2137 = vmul.f32 %v2129, 0.2
    %v2138 = vmax.f32 %v2122, %v2130
    %v2139 = vmax.f32 %v2123, %v2131
    %v2140 = vmax.f32 %v2124, %v2132
    %v2141 = vmax.f32 %v2125, %v2133
    %v2142 = vmax.f32 %v2126, %v2134
    %v2143 = vmax.f32 %v2127, %v2135
    %v2144 = vmax.f32 %v2128, %v2136
    %v2145 = vmax.f32 %v2129, %v2137
    %s2146 = smul.u32 4, 128
    %s2147 = smul.u32 %s2146, 1
    %s2148 = sshll.u32 %s2147, 4
    %2149 = dma.done %s112, %s2148
    %v2150 = vpack.c.bf16 %v2138, %v2138
    %v2151 = vpack.c.bf16 %v2139, %v2139
    %v2152 = vpack.c.bf16 %v2140, %v2140
    %v2153 = vpack.c.bf16 %v2141, %v2141
    %v2154 = vpack.c.bf16 %v2142, %v2142
    %v2155 = vpack.c.bf16 %v2143, %v2143
    %v2156 = vpack.c.bf16 %v2144, %v2144
    %v2157 = vpack.c.bf16 %v2145, %v2145
    %v2158 = vld [vmem:[#allocation3] sm:$0xff]
    %v2159 = vld [vmem:[#allocation3 + $0x8] sm:$0xff]
    %v2160 = vld [vmem:[#allocation3 + $0x10] sm:$0xff]
    %v2161 = vld [vmem:[#allocation3 + $0x18] sm:$0xff]
    %v2162 = vld [vmem:[#allocation3 + $0x20] sm:$0xff]
    %v2163 = vld [vmem:[#allocation3 + $0x28] sm:$0xff]
    %v2164 = vld [vmem:[#allocation3 + $0x30] sm:$0xff]
    %v2165 = vld [vmem:[#allocation3 + $0x38] sm:$0xff]
    %v2166 = vld [vmem:[#allocation3 + $0x40] sm:$0xff]
    %v2167 = vld [vmem:[#allocation3 + $0x48] sm:$0xff]
    %v2168 = vld [vmem:[#allocation3 + $0x50] sm:$0xff]
    %v2169 = vld [vmem:[#allocation3 + $0x58] sm:$0xff]
    %v2170 = vld [vmem:[#allocation3 + $0x60] sm:$0xff]
    %v2171 = vld [vmem:[#allocation3 + $0x68] sm:$0xff]
    %v2172 = vld [vmem:[#allocation3 + $0x70] sm:$0xff]
    %v2173 = vld [vmem:[#allocation3 + $0x78] sm:$0xff]
    %v2174 = vld [vmem:[#allocation3 + $0x80] sm:$0xff]
    %v2175 = vld [vmem:[#allocation3 + $0x88] sm:$0xff]
    %v2176 = vld [vmem:[#allocation3 + $0x90] sm:$0xff]
    %v2177 = vld [vmem:[#allocation3 + $0x98] sm:$0xff]
    %v2178 = vld [vmem:[#allocation3 + $0xa0] sm:$0xff]
    %v2179 = vld [vmem:[#allocation3 + $0xa8] sm:$0xff]
    %v2180 = vld [vmem:[#allocation3 + $0xb0] sm:$0xff]
    %v2181 = vld [vmem:[#allocation3 + $0xb8] sm:$0xff]
    %v2182 = vld [vmem:[#allocation3 + $0xc0] sm:$0xff]
    %v2183 = vld [vmem:[#allocation3 + $0xc8] sm:$0xff]
    %v2184 = vld [vmem:[#allocation3 + $0xd0] sm:$0xff]
    %v2185 = vld [vmem:[#allocation3 + $0xd8] sm:$0xff]
    %v2186 = vld [vmem:[#allocation3 + $0xe0] sm:$0xff]
    %v2187 = vld [vmem:[#allocation3 + $0xe8] sm:$0xff]
    %v2188 = vld [vmem:[#allocation3 + $0xf0] sm:$0xff]
    %v2189 = vld [vmem:[#allocation3 + $0xf8] sm:$0xff]
    %v2190 = vld [vmem:[#allocation3 + $0x100] sm:$0xff]
    %v2191 = vld [vmem:[#allocation3 + $0x108] sm:$0xff]
    %v2192 = vld [vmem:[#allocation3 + $0x110] sm:$0xff]
    %v2193 = vld [vmem:[#allocation3 + $0x118] sm:$0xff]
    %v2194 = vld [vmem:[#allocation3 + $0x120] sm:$0xff]
    %v2195 = vld [vmem:[#allocation3 + $0x128] sm:$0xff]
    %v2196 = vld [vmem:[#allocation3 + $0x130] sm:$0xff]
    %v2197 = vld [vmem:[#allocation3 + $0x138] sm:$0xff]
    %v2198 = vld [vmem:[#allocation3 + $0x140] sm:$0xff]
    %v2199 = vld [vmem:[#allocation3 + $0x148] sm:$0xff]
    %v2200 = vld [vmem:[#allocation3 + $0x150] sm:$0xff]
    %v2201 = vld [vmem:[#allocation3 + $0x158] sm:$0xff]
    %v2202 = vld [vmem:[#allocation3 + $0x160] sm:$0xff]
    %v2203 = vld [vmem:[#allocation3 + $0x168] sm:$0xff]
    %v2204 = vld [vmem:[#allocation3 + $0x170] sm:$0xff]
    %v2205 = vld [vmem:[#allocation3 + $0x178] sm:$0xff]
    %v2206 = vld [vmem:[#allocation3 + $0x180] sm:$0xff]
    %v2207 = vld [vmem:[#allocation3 + $0x188] sm:$0xff]
    %v2208 = vld [vmem:[#allocation3 + $0x190] sm:$0xff]
    %v2209 = vld [vmem:[#allocation3 + $0x198] sm:$0xff]
    %v2210 = vld [vmem:[#allocation3 + $0x1a0] sm:$0xff]
    %v2211 = vld [vmem:[#allocation3 + $0x1a8] sm:$0xff]
    %v2212 = vld [vmem:[#allocation3 + $0x1b0] sm:$0xff]
    %v2213 = vld [vmem:[#allocation3 + $0x1b8] sm:$0xff]
    %v2214 = vld [vmem:[#allocation3 + $0x1c0] sm:$0xff]
    %v2215 = vld [vmem:[#allocation3 + $0x1c8] sm:$0xff]
    %v2216 = vld [vmem:[#allocation3 + $0x1d0] sm:$0xff]
    %v2217 = vld [vmem:[#allocation3 + $0x1d8] sm:$0xff]
    %v2218 = vld [vmem:[#allocation3 + $0x1e0] sm:$0xff]
    %v2219 = vld [vmem:[#allocation3 + $0x1e8] sm:$0xff]
    %v2220 = vld [vmem:[#allocation3 + $0x1f0] sm:$0xff]
    %v2221 = vld [vmem:[#allocation3 + $0x1f8] sm:$0xff]
    %2222 = vmatprep.subr.bf16.mxu0 0
    %2223 = vmatpush1.bf16.msra.mxu0 %v2158
    %2224 = vmatprep.subr.bf16.mxu0 0
    %2225 = vmatpush1.bf16.msra.mxu0 %v2159
    %2226 = vmatprep.subr.bf16.mxu0 0
    %2227 = vmatpush1.bf16.msra.mxu0 %v2160
    %2228 = vmatprep.subr.bf16.mxu0 0
    %2229 = vmatpush1.bf16.msra.mxu0 %v2161
    %2230 = vmatprep.subr.bf16.mxu0 0
    %2231 = vmatpush1.bf16.msra.mxu0 %v2162
    %2232 = vmatprep.subr.bf16.mxu0 0
    %2233 = vmatpush1.bf16.msra.mxu0 %v2163
    %2234 = vmatprep.subr.bf16.mxu0 0
    %2235 = vmatpush1.bf16.msra.mxu0 %v2164
    %2236 = vmatprep.subr.bf16.mxu0 0
    %2237 = vmatpush1.bf16.msra.mxu0 %v2165
    %2238 = vmatprep.subr.bf16.mxu0 0
    %2239 = vmatpush1.bf16.msra.mxu0 %v2166
    %2240 = vmatprep.subr.bf16.mxu0 0
    %2241 = vmatpush1.bf16.msra.mxu0 %v2167
    %2242 = vmatprep.subr.bf16.mxu0 0
    %2243 = vmatpush1.bf16.msra.mxu0 %v2168
    %2244 = vmatprep.subr.bf16.mxu0 0
    %2245 = vmatpush1.bf16.msra.mxu0 %v2169
    %2246 = vmatprep.subr.bf16.mxu0 0
    %2247 = vmatpush1.bf16.msra.mxu0 %v2170
    %2248 = vmatprep.subr.bf16.mxu0 0
    %2249 = vmatpush1.bf16.msra.mxu0 %v2171
    %2250 = vmatprep.subr.bf16.mxu0 0
    %2251 = vmatpush1.bf16.msra.mxu0 %v2172
    %2252 = vmatprep.subr.bf16.mxu0 0
    %2253 = vmatpush1.bf16.msra.mxu0 %v2173
    %2254 = vmatprep.mubr.bf16.mxu0 %v2151
    %2255 = vmatmul.mubr.bf16.gmra.mrb[0].mxu0 %v2150
    %v2256 = vpop.f32.mrb[0].mxu0
    %v2257 = vadd.f32 %v141, %v2256
    %v2258 = vpop.f32.mrb[0].mxu0
    %v2259 = vpop.f32.mrb[0].mxu0
    %v2260 = vpop.f32.mrb[0].mxu0
    %2261 = vdwg.mxu0
    %2262 = vmatprep.subr.bf16.mxu0 0
    %2263 = vmatpush1.bf16.msra.mxu0 %v2174
    %2264 = vmatprep.subr.bf16.mxu0 0
    %2265 = vmatpush1.bf16.msra.mxu0 %v2175
    %2266 = vmatprep.subr.bf16.mxu0 0
    %2267 = vmatpush1.bf16.msra.mxu0 %v2176
    %2268 = vmatprep.subr.bf16.mxu0 0
    %2269 = vmatpush1.bf16.msra.mxu0 %v2177
    %2270 = vmatprep.subr.bf16.mxu0 0
    %2271 = vmatpush1.bf16.msra.mxu0 %v2178
    %2272 = vmatprep.subr.bf16.mxu0 0
    %2273 = vmatpush1.bf16.msra.mxu0 %v2179
    %2274 = vmatprep.subr.bf16.mxu0 0
    %2275 = vmatpush1.bf16.msra.mxu0 %v2180
    %2276 = vmatprep.subr.bf16.mxu0 0
    %2277 = vmatpush1.bf16.msra.mxu0 %v2181
    %2278 = vmatprep.subr.bf16.mxu0 0
    %2279 = vmatpush1.bf16.msra.mxu0 %v2182
    %2280 = vmatprep.subr.bf16.mxu0 0
    %2281 = vmatpush1.bf16.msra.mxu0 %v2183
    %2282 = vmatprep.subr.bf16.mxu0 0
    %2283 = vmatpush1.bf16.msra.mxu0 %v2184
    %2284 = vmatprep.subr.bf16.mxu0 0
    %2285 = vmatpush1.bf16.msra.mxu0 %v2185
    %2286 = vmatprep.subr.bf16.mxu0 0
    %2287 = vmatpush1.bf16.msra.mxu0 %v2186
    %2288 = vmatprep.subr.bf16.mxu0 0
    %2289 = vmatpush1.bf16.msra.mxu0 %v2187
    %2290 = vmatprep.subr.bf16.mxu0 0
    %2291 = vmatpush1.bf16.msra.mxu0 %v2188
    %2292 = vmatprep.subr.bf16.mxu0 0
    %2293 = vmatpush1.bf16.msra.mxu0 %v2189
    %2294 = vmatprep.mubr.bf16.mxu0 %v2153
    %2295 = vmatmul.mubr.bf16.gmra.mrb[0].mxu0 %v2152
    %v2296 = vpop.f32.mrb[0].mxu0
    %v2297 = vadd.f32 %v2257, %v2296
    %v2298 = vpop.f32.mrb[0].mxu0
    %v2299 = vpop.f32.mrb[0].mxu0
    %v2300 = vpop.f32.mrb[0].mxu0
    %2301 = vdwg.mxu0
    %2302 = vmatprep.subr.bf16.mxu0 0
    %2303 = vmatpush1.bf16.msra.mxu0 %v2190
    %2304 = vmatprep.subr.bf16.mxu0 0
    %2305 = vmatpush1.bf16.msra.mxu0 %v2191
    %2306 = vmatprep.subr.bf16.mxu0 0
    %2307 = vmatpush1.bf16.msra.mxu0 %v2192
    %2308 = vmatprep.subr.bf16.mxu0 0
    %2309 = vmatpush1.bf16.msra.mxu0 %v2193
    %2310 = vmatprep.subr.bf16.mxu0 0
    %2311 = vmatpush1.bf16.msra.mxu0 %v2194
    %2312 = vmatprep.subr.bf16.mxu0 0
    %2313 = vmatpush1.bf16.msra.mxu0 %v2195
    %2314 = vmatprep.subr.bf16.mxu0 0
    %2315 = vmatpush1.bf16.msra.mxu0 %v2196
    %2316 = vmatprep.subr.bf16.mxu0 0
    %2317 = vmatpush1.bf16.msra.mxu0 %v2197
    %2318 = vmatprep.subr.bf16.mxu0 0
    %2319 = vmatpush1.bf16.msra.mxu0 %v2198
    %2320 = vmatprep.subr.bf16.mxu0 0
    %2321 = vmatpush1.bf16.msra.mxu0 %v2199
    %2322 = vmatprep.subr.bf16.mxu0 0
    %2323 = vmatpush1.bf16.msra.mxu0 %v2200
    %2324 = vmatprep.subr.bf16.mxu0 0
    %2325 = vmatpush1.bf16.msra.mxu0 %v2201
    %2326 = vmatprep.subr.bf16.mxu0 0
    %2327 = vmatpush1.bf16.msra.mxu0 %v2202
    %2328 = vmatprep.subr.bf16.mxu0 0
    %2329 = vmatpush1.bf16.msra.mxu0 %v2203
    %2330 = vmatprep.subr.bf16.mxu0 0
    %2331 = vmatpush1.bf16.msra.mxu0 %v2204
    %2332 = vmatprep.subr.bf16.mxu0 0
    %2333 = vmatpush1.bf16.msra.mxu0 %v2205
    %2334 = vmatprep.mubr.bf16.mxu0 %v2155
    %2335 = vmatmul.mubr.bf16.gmra.mrb[0].mxu0 %v2154
    %v2336 = vpop.f32.mrb[0].mxu0
    %v2337 = vadd.f32 %v2297, %v2336
    %v2338 = vpop.f32.mrb[0].mxu0
    %v2339 = vpop.f32.mrb[0].mxu0
    %v2340 = vpop.f32.mrb[0].mxu0
    %2341 = vdwg.mxu0
    %2342 = vmatprep.subr.bf16.mxu0 0
    %2343 = vmatpush1.bf16.msra.mxu0 %v2206
    %2344 = vmatprep.subr.bf16.mxu0 0
    %2345 = vmatpush1.bf16.msra.mxu0 %v2207
    %2346 = vmatprep.subr.bf16.mxu0 0
    %2347 = vmatpush1.bf16.msra.mxu0 %v2208
    %2348 = vmatprep.subr.bf16.mxu0 0
    %2349 = vmatpush1.bf16.msra.mxu0 %v2209
    %2350 = vmatprep.subr.bf16.mxu0 0
    %2351 = vmatpush1.bf16.msra.mxu0 %v2210
    %2352 = vmatprep.subr.bf16.mxu0 0
    %2353 = vmatpush1.bf16.msra.mxu0 %v2211
    %2354 = vmatprep.subr.bf16.mxu0 0
    %2355 = vmatpush1.bf16.msra.mxu0 %v2212
    %2356 = vmatprep.subr.bf16.mxu0 0
    %2357 = vmatpush1.bf16.msra.mxu0 %v2213
    %2358 = vmatprep.subr.bf16.mxu0 0
    %2359 = vmatpush1.bf16.msra.mxu0 %v2214
    %2360 = vmatprep.subr.bf16.mxu0 0
    %2361 = vmatpush1.bf16.msra.mxu0 %v2215
    %2362 = vmatprep.subr.bf16.mxu0 0
    %2363 = vmatpush1.bf16.msra.mxu0 %v2216
    %2364 = vmatprep.subr.bf16.mxu0 0
    %2365 = vmatpush1.bf16.msra.mxu0 %v2217
    %2366 = vmatprep.subr.bf16.mxu0 0
    %2367 = vmatpush1.bf16.msra.mxu0 %v2218
    %2368 = vmatprep.subr.bf16.mxu0 0
    %2369 = vmatpush1.bf16.msra.mxu0 %v2219
    %2370 = vmatprep.subr.bf16.mxu0 0
    %2371 = vmatpush1.bf16.msra.mxu0 %v2220
    %2372 = vmatprep.subr.bf16.mxu0 0
    %2373 = vmatpush1.bf16.msra.mxu0 %v2221
    %2374 = vmatprep.mubr.bf16.mxu0 %v2157
    %2375 = vmatmul.mubr.bf16.gmra.mrb[0].mxu0 %v2156
    %v2376 = vpop.f32.mrb[0].mxu0
    %v2377 = vadd.f32 %v2337, %v2376
    %v2378 = vpop.f32.mrb[0].mxu0
    %v2379 = vpop.f32.mrb[0].mxu0
    %v2380 = vpop.f32.mrb[0].mxu0
    %2381 = vdwg.mxu0
    %2382 = vst [vmem:[#allocation13] sm:$0xff] %v2377
    // Predicated region
    $region42: #{generator_forward.1} parent=1 // pred_check
      _
    $region43: #{generator_forward.1} parent=1 // pred_check_branch
      %2384 = sbr.rel (0) target = $region45
    $region44: #{generator_forward.1} parent=1 // pred_region
      %s2386 = ssub.s32 128, 128
      %2387 = vsyncadd [#allocation7], %s2386
      %s2389 = sshll.u32 [#allocation13], 4
      %s2390 = int_to_ptr.vmem [resolvable:$true] %s2389
      %2392 = dma.vmem_to_hbm [thread:$0]  %s2390, 128, %s7, [#allocation7]
    $region45: #{generator_forward.1} parent=1 // pred_fallthru
      _
    // Predicated region
    $region46: #{generator_forward.1} parent=1 // pred_check
      _
    $region47: #{generator_forward.1} parent=1 // pred_check_branch
      %2394 = sbr.rel (0) target = $region49
    $region48: #{generator_forward.1} parent=1 // pred_region
      %2395 = dma.done [#allocation7], 128
    $region49: #{generator_forward.1} parent=1 // pred_fallthru
      _
    %2396 = vsyncpa [#allocation6], 1
    %2397 = vsyncpa [#allocation9], 1
    %2398 = vsyncpa [#allocation12], 1
    %2399 = vsyncpa [#allocation7], 1
  %2400 = vsyncmov [#allocation4]
  %s2401 = vpop.sfrf %2400
  %p2402 = scmp.eq.s32.totalorder %s2401, 0
  %p2403 = pneg %p2402
  %2405 = shalt.err (%p2403)
  %s2406 = scalar_lea.sflag [#allocation4], 1
  %2407 = vsyncmov %s2406
  %s2408 = vpop.sfrf %2407
  %p2409 = scmp.eq.s32.totalorder %s2408, 0
  %p2410 = pneg %p2409
  %2412 = shalt.err (%p2410)

</llo_original>
